<compile_context>
chip_gen: v7x
topology: tpu7x:2x2x1
jax: 0.10.0
libtpu: 0.0.40
codegen_flags: <defaults>
</compile_context>

<pallas_src>
import jax
import jax.numpy as jnp
from jax.experimental import pallas as pl
from jax.experimental.pallas import tpu as pltpu


def _dot_t(a, b):
    """a (M, K) contracted with b (N, K) on the last dims -> (M, N), f32 acc."""
    return jax.lax.dot_general(a, b, (((1,), (1,)), ((), ())),
                               preferred_element_type=jnp.float32)


def _vmem_limit_bytes():
    # ~96 MiB on v5e/v6e (128 MiB physical), 48 MiB on v7x (64 MiB physical).
    try:
        cap = int(pltpu.get_tpu_info().vmem_capacity_bytes)
        return min(cap * 3 // 4, 100 * 1024 * 1024)
    except Exception:
        return 48 * 1024 * 1024          # conservative: safe on every generation


def _auto_block_rows(n, p, vmem_limit_bytes):
    """Largest row-block TM (divisor of n, multiple of 8) whose double-buffered
    bf16 adjacency slice 2 * P * TM * N * 2B stays under ~40% of the VMEM limit."""
    budget = 0.4 * vmem_limit_bytes
    if n <= 8 or 2 * p * n * n * 2 <= budget:
        return n                          # adjacency fully VMEM-resident
    cands = [tm for tm in range(8, n, 8)
             if n % tm == 0 and 2 * p * tm * n * 2 <= budget]
    if cands:
        return max(cands)
    return n if n % 8 else 8


# --------------------------------------------------------------------------
# Fused kernel: GCN (all relations, both sequences) + semantic attention +
# readout + bilinear discriminator; grid = row blocks of the graph.
# --------------------------------------------------------------------------
def _dgi_fused_kernel(x1_ref, x2_ref, adj_ref, w_ref, b_ref, a_ref, wfold_ref,
                      wb_ref, bb_ref, out_ref,
                      xw1_scr, xw2_scr, h1_scr, h2_scr):
    # x1/x2:  (N, F)        f32   nodes of seq1 / corrupted seq2
    # adj:    (P, TM, N)    bf16  row block of every relation's adjacency
    # w:      (F, P*H)      bf16  per-relation GCN weights concatenated on lanes
    # b, a:   (1, 2*P*H)    f32   bias / PReLU slope, lane layout = z layout
    # wfold:  (2*P*H, 2P)   f32   block-diag folded attention (col = seq*P + p)
    # wb:     (H, H)        f32   bilinear discriminator weight
    # bb:     (1, 1)        f32   bilinear discriminator bias
    # out:    (1, 2N)       f32   [sc_1 | sc_2]
    P, TM, N = adj_ref.shape
    H = xw1_scr.shape[-1] // P
    i = pl.program_id(0)
    nb = pl.num_programs(0)

    # ---- step 0 only: X @ W for both sequences (wide 96-lane RHS), kept in VMEM
    @pl.when(i == 0)
    def _():
        xw1_scr[...] = jnp.dot(x1_ref[...].astype(w_ref.dtype), w_ref[...],
                               preferred_element_type=jnp.float32
                               ).astype(xw1_scr.dtype)
        xw2_scr[...] = jnp.dot(x2_ref[...].astype(w_ref.dtype), w_ref[...],
                               preferred_element_type=jnp.float32
                               ).astype(xw2_scr.dtype)

    xw1 = xw1_scr[...]                                   # (N, P*H) compute dtype
    xw2 = xw2_scr[...]

    # ---- GCN aggregation: ONE matmul per relation, seq1|seq2 fused on lanes ----
    pre = []
    for p in range(P):                                   # static unroll over relations
        rhs = jnp.concatenate([xw1[:, p * H:(p + 1) * H],
                               xw2[:, p * H:(p + 1) * H]], axis=1)      # (N, 2H)
        pre.append(jnp.dot(adj_ref[p], rhs,
                           preferred_element_type=jnp.float32))          # (TM, 2H)
    pre = jnp.concatenate(pre, axis=1) + b_ref[...]      # (TM, 2PH) full-width bias
    z = jnp.where(pre >= 0.0, pre, a_ref[...] * pre)     # PReLU, full-width

    # ---- attention scores: one (TM, 2PH) @ (2PH, 2P) matmul (replaces 2P 1-col ones)
    s = jnp.tanh(jnp.dot(z, wfold_ref[...], preferred_element_type=jnp.float32))

    def _softmax(sv):                                    # softmax over the P relations
        m = jnp.max(sv, axis=1, keepdims=True)
        e = jnp.exp(sv - m)
        return e / jnp.sum(e, axis=1, keepdims=True)

    beta1 = _softmax(s[:, 0:P])                          # (TM, P)
    beta2 = _softmax(s[:, P:2 * P])

    # ---- attention-weighted combination of the per-relation embeddings ---------
    h1 = beta1[:, 0:1] * z[:, 0:H]
    h2 = beta2[:, 0:1] * z[:, H:2 * H]
    for p in range(1, P):
        h1 = h1 + beta1[:, p:p + 1] * z[:, 2 * p * H:2 * p * H + H]
        h2 = h2 + beta2[:, p:p + 1] * z[:, 2 * p * H + H:2 * (p + 1) * H]

    r0 = pl.multiple_of(i * TM, TM)
    h1_scr[pl.ds(r0, TM), :] = h1
    h2_scr[pl.ds(r0, TM), :] = h2

    # ---- last row block: readout + bilinear discriminator, one lane-dense store
    @pl.when(i == nb - 1)
    def _():
        h1_all = h1_scr[...]                                             # (N, H)
        c = jax.nn.sigmoid(jnp.mean(h1_all, axis=0, keepdims=True))      # (1, H)
        wc = _dot_t(c, wb_ref[...])                                      # Wb @ c^T
        h_cat = jnp.concatenate([h1_all, h2_scr[...]], axis=0)           # (2N, H)
        out_ref[...] = _dot_t(wc, h_cat) + bb_ref[...]                   # (1, 2N)


# --------------------------------------------------------------------------
# One-time preprocessing (static per graph / per parameter update).
# --------------------------------------------------------------------------
def prepare_inputs(params, adjs, precision="bfloat16"):
    """Cast/repack adjacency and parameters once; pass the result to dgi_forward.
    precision="float32" keeps f32 adjacency/weight operands for accuracy-sensitive runs."""
    P, F, H = params["gcn_w"].shape
    cdt = jnp.bfloat16 if precision == "bfloat16" else jnp.float32
    hi = jax.lax.Precision.HIGHEST

    adj_c = adjs.astype(cdt)                                             # (P, N, N)
    w_wide = jnp.transpose(params["gcn_w"], (1, 0, 2)).reshape(F, P * H).astype(cdt)

    # lane layout of z inside the kernel: block p = [seq1 stripe (H) | seq2 stripe (H)]
    b_cat = jnp.concatenate([params["gcn_b"], params["gcn_b"]],
                            axis=2).transpose(1, 0, 2).reshape(1, 2 * P * H)
    a_cat = jnp.broadcast_to(params["prelu_a"],
                             (P, 1, 2 * H)).transpose(1, 0, 2).reshape(1, 2 * P * H)

    # fold the two-stage attention projection, then lay it out block-diagonally so
    # the kernel computes every (relation, sequence) score with ONE matmul.
    wfold = jnp.einsum("phs,pqs->pqh", params["att_w"], params["att_y"],
                       precision=hi)                                     # (P, 1, H)
    wfold_bd = jnp.zeros((2 * P * H, 2 * P), jnp.float32)
    for p in range(P):
        wfold_bd = wfold_bd.at[2 * p * H:2 * p * H + H, p].set(wfold[p, 0])          # seq1
        wfold_bd = wfold_bd.at[2 * p * H + H:2 * (p + 1) * H, P + p].set(wfold[p, 0])  # seq2

    return {"adj": adj_c, "w": w_wide, "b": b_cat, "a": a_cat, "wfold": wfold_bd,
            "disc_w": params["disc_w"], "disc_b": params["disc_b"],
            "dims": (P, F, H)}


# --------------------------------------------------------------------------
# Forward wrapper (matches the PyTorch module's forward signature).
# --------------------------------------------------------------------------
def dgi_forward(prep, seq1, seq2, sparse=False, msk=None,
                samp_bias1=None, samp_bias2=None, block_rows=None):
    # TODO(synk): sparse adjacency (torch.spmm), msk and samp_bias branches not
    # implemented; this is the dense / msk=None / bias=None path of the module.
    del sparse, msk, samp_bias1, samp_bias2
    P, F, H = prep["dims"]
    N = seq1.shape[-2]
    x1 = seq1.reshape(N, F)                 # drop the size-1 batch dim (layout-free)
    x2 = seq2.reshape(N, F)

    vmem_limit = _vmem_limit_bytes()
    TM = block_rows if block_rows is not None else _auto_block_rows(N, P, vmem_limit)
    assert N % TM == 0 and (TM == N or TM % 8 == 0), (N, TM)
    nb = N // TM

    def full(shape):
        return pl.BlockSpec(shape, lambda i, _s=shape: tuple(0 for _ in _s))

    grid_spec = pltpu.PrefetchScalarGridSpec(
        num_scalar_prefetch=0,
        grid=(nb,),
        in_specs=[
            full((N, F)),                                    # x1
            full((N, F)),                                    # x2
            pl.BlockSpec((P, TM, N), lambda i: (0, i, 0)),   # adjacency row blocks
            full((F, P * H)),                                # W (wide)
            full((1, 2 * P * H)),                            # bias (lane-concat)
            full((1, 2 * P * H)),                            # PReLU slope (lane-concat)
            full((2 * P * H, 2 * P)),                        # folded attention (block-diag)
            full((H, H)),                                    # bilinear W
            full((1, 1)),                                    # bilinear b
        ],
        out_specs=pl.BlockSpec((1, 2 * N), lambda i: (0, 0)),
        scratch_shapes=[
            pltpu.VMEM((N, P * H), prep["adj"].dtype),       # xw1 (resident)
            pltpu.VMEM((N, P * H), prep["adj"].dtype),       # xw2 (resident)
            pltpu.VMEM((N, H), jnp.float32),                 # h1
            pltpu.VMEM((N, H), jnp.float32),                 # h2
        ],
    )

    return pl.pallas_call(
        _dgi_fused_kernel,
        out_shape=jax.ShapeDtypeStruct((1, 2 * N), jnp.float32),
        grid_spec=grid_spec,
        compiler_params=pltpu.CompilerParams(
            # 'arbitrary': row blocks carry the xw/h scratch and the final readout
            # phase (see TODO(synk) above re: the 2-call 'parallel' variant for v7x).
            dimension_semantics=("arbitrary",),
            vmem_limit_bytes=vmem_limit),
    )(x1, x2, prep["adj"], prep["w"], prep["b"], prep["a"], prep["wfold"],
      prep["disc_w"], prep["disc_b"])


# --------------------------------------------------------------------------
# Deterministic parameter init (shapes from the module __init__).
# --------------------------------------------------------------------------
def init_params(key, nfeat, nhid, shid, P):
    ks = jax.random.split(key, 5)

    def xavier(k, shape, fan_in, fan_out):
        lim = (6.0 / (fan_in + fan_out)) ** 0.5
        return jax.random.uniform(k, shape, jnp.float32, -lim, lim)

    return {
        "gcn_w": xavier(ks[0], (P, nfeat, nhid), nfeat, nhid),     # GCN fc (transposed)
        "gcn_b": jnp.zeros((P, 1, nhid), jnp.float32),             # GCN bias (init 0)
        "prelu_a": jnp.full((P, 1, 1), 0.25, jnp.float32),         # nn.PReLU(): one scalar
        "att_w": xavier(ks[1], (P, nhid, shid), nhid, shid),       # Linear(nhid, shid)
        "att_y": xavier(ks[2], (P, 1, shid), shid, 1),             # Linear(shid, 1)
        "disc_w": xavier(ks[3], (nhid, nhid), nhid, nhid),         # Bilinear weight
        "disc_b": jax.random.uniform(ks[4], (1, 1), jnp.float32, -0.1, 0.1),
    }


# --------------------------------------------------------------------------
# Pure-JAX reference.  The kernel feeds the two large matmuls (x@W, A@(xW)) to
# the MXU in bf16 with f32 accumulation; the reference applies the same operand
# rounding so the check isolates kernel correctness from the intentional
# low-precision operands.
# --------------------------------------------------------------------------
def dgi_reference(params, seq1, seq2, adjs):
    hi = jax.lax.Precision.HIGHEST
    bf = lambda v: v.astype(jnp.bfloat16).astype(jnp.float32)

    def hgcn(x):
        xw = jnp.einsum("nf,pfh->pnh", bf(x), bf(params["gcn_w"]), precision=hi)
        h = jnp.einsum("pnm,pmh->pnh", bf(adjs), bf(xw), precision=hi) + params["gcn_b"]
        z = jnp.where(h >= 0, h, params["prelu_a"] * h)                 # (P, N, H)
        s = jnp.einsum("pnh,phs->pns", z, params["att_w"], precision=hi)
        score = jnp.tanh(jnp.sum(s * params["att_y"], axis=-1))         # (P, N)
        beta = jax.nn.softmax(score, axis=0)
        return jnp.sum(beta[:, :, None] * z, axis=0)                    # (N, H)

    h1 = hgcn(seq1[0])
    h2 = hgcn(seq2[0])
    c = jax.nn.sigmoid(jnp.mean(h1, axis=0))
    wc = jnp.einsum("hk,k->h", params["disc_w"], c, precision=hi)        # Wb @ c^T
    sc1 = jnp.einsum("nh,h->n", h1, wc, precision=hi) + params["disc_b"][0, 0]
    sc2 = jnp.einsum("nh,h->n", h2, wc, precision=hi) + params["disc_b"][0, 0]
    return jnp.concatenate([sc1[None, :], sc2[None, :]], axis=1)


if __name__ == "__main__":
    N, nfeat, nhid, shid, P = 64, 32, 32, 16, 3

    key = jax.random.PRNGKey(0)
    k_seq1, k_seq2, k_adj, k_par = jax.random.split(key, 4)

    seq1 = jax.random.normal(k_seq1, (1, N, nfeat), jnp.float32)
    seq2 = jax.random.normal(k_seq2, (1, N, nfeat), jnp.float32)

    adj_keys = jax.random.split(k_adj, P)
    adjs = []
    for p in range(P):
        a = (jax.random.uniform(adj_keys[p], (N, N)) < 0.1).astype(jnp.float32)
        a = a + a.T + jnp.eye(N, dtype=jnp.float32)
        a = a / jnp.sum(a, axis=1, keepdims=True)                  # row-normalized
        adjs.append(a)
    adjs = jnp.stack(adjs)                                         # (P, N, N)

    params = init_params(k_par, nfeat, nhid, shid, P)

    # one-time preprocessing (static per graph / per parameter update)
    prep = prepare_inputs(params, adjs)

    # (a) row-tiled path (2 row blocks of 32) and (b) fully VMEM-resident path
    ret_tiled = jax.block_until_ready(
        dgi_forward(prep, seq1, seq2, sparse=False, msk=None,
                    samp_bias1=None, samp_bias2=None, block_rows=32))
    ret_full = jax.block_until_ready(
        dgi_forward(prep, seq1, seq2, sparse=False, msk=None,
                    samp_bias1=None, samp_bias2=None))
    assert ret_tiled.shape == (1, 2 * N), ret_tiled.shape
    assert ret_full.shape == (1, 2 * N), ret_full.shape

    ref = jax.block_until_ready(dgi_reference(params, seq1, seq2, adjs))
    err_t = float(jnp.max(jnp.abs(ret_tiled - ref)))
    err_f = float(jnp.max(jnp.abs(ret_full - ref)))
    assert err_t < 1e-2, f"tiled path: max abs error vs reference = {err_t}"
    assert err_f < 1e-2, f"resident path: max abs error vs reference = {err_f}"

    print("KERNEL_OK")
</pallas_src>

<mosaic_0001>
module attributes {stable_mosaic.version = 11 : i64} {
  func.func @_dgi_fused_kernel(%arg0: i32, %arg1: memref<64x32xf32, #tpu.memory_space<vmem>>, %arg2: memref<64x32xf32, #tpu.memory_space<vmem>>, %arg3: memref<3x32x64xbf16, #tpu.memory_space<vmem>>, %arg4: memref<32x96xbf16, #tpu.memory_space<vmem>>, %arg5: memref<1x192xf32, #tpu.memory_space<vmem>>, %arg6: memref<1x192xf32, #tpu.memory_space<vmem>>, %arg7: memref<192x6xf32, #tpu.memory_space<vmem>>, %arg8: memref<32x32xf32, #tpu.memory_space<vmem>>, %arg9: memref<1x1xf32, #tpu.memory_space<vmem>>, %arg10: memref<1x128xf32, #tpu.memory_space<vmem>>, %arg11: memref<64x96xbf16, #tpu.memory_space<vmem>>, %arg12: memref<64x96xbf16, #tpu.memory_space<vmem>>, %arg13: memref<64x32xf32, #tpu.memory_space<vmem>>, %arg14: memref<64x32xf32, #tpu.memory_space<vmem>>) attributes {dimension_semantics = [#tpu.dimension_semantics<arbitrary>], iteration_bounds = array<i64: 2>, scalar_prefetch = 0 : i64, scratch_operands = 4 : i64, tpu.core_type = #tpu.core_type<tc>, window_params = [{pipeline_mode = #tpu.pipeline_mode<synchronous>, transform_indices = @transform_0, window_bounds = array<i64: 64, 32>}, {pipeline_mode = #tpu.pipeline_mode<synchronous>, transform_indices = @transform_1, window_bounds = array<i64: 64, 32>}, {transform_indices = @transform_2, window_bounds = array<i64: 3, 32, 64>}, {pipeline_mode = #tpu.pipeline_mode<synchronous>, transform_indices = @transform_3, window_bounds = array<i64: 32, 96>}, {pipeline_mode = #tpu.pipeline_mode<synchronous>, transform_indices = @transform_4, window_bounds = array<i64: 1, 192>}, {pipeline_mode = #tpu.pipeline_mode<synchronous>, transform_indices = @transform_5, window_bounds = array<i64: 1, 192>}, {pipeline_mode = #tpu.pipeline_mode<synchronous>, transform_indices = @transform_6, window_bounds = array<i64: 192, 6>}, {pipeline_mode = #tpu.pipeline_mode<synchronous>, transform_indices = @transform_7, window_bounds = array<i64: 32, 32>}, {pipeline_mode = #tpu.pipeline_mode<synchronous>, transform_indices = @transform_8, window_bounds = array<i64: 1, 1>}, {pipeline_mode = #tpu.pipeline_mode<synchronous>, transform_indices = @transform_9, window_bounds = array<i64: 1, 128>}]} {
    %c0_i32 = arith.constant 0 : i32
    %0 = arith.cmpi eq, %arg0, %c0_i32 : i32
    %1 = arith.extui %0 : i1 to i32
    %c0_i32_0 = arith.constant 0 : i32
    %2 = arith.cmpi ne, %1, %c0_i32_0 : i32
    scf.if %2 {
      %c0_28 = arith.constant 0 : index
      %c0_29 = arith.constant 0 : index
      %93 = vector.load %arg1[%c0_28, %c0_29] : memref<64x32xf32, #tpu.memory_space<vmem>>, vector<64x32xf32>
      %94 = arith.truncf %93 : vector<64x32xf32> to vector<64x32xbf16>
      %c0_30 = arith.constant 0 : index
      %c0_31 = arith.constant 0 : index
      %95 = vector.load %arg4[%c0_30, %c0_31] : memref<32x96xbf16, #tpu.memory_space<vmem>>, vector<32x96xbf16>
      %cst_32 = arith.constant dense<0.000000e+00> : vector<64x96xf32>
      %96 = tpu.matmul %94, %95, %cst_32 {dimension_numbers = #tpu.dot_dimension_numbers<[1], [0], [0], [1], [0, 0, 1, 1], [], []>} : vector<64x32xbf16>, vector<32x96xbf16>, vector<64x96xf32> -> vector<64x96xf32>
      %97 = arith.truncf %96 : vector<64x96xf32> to vector<64x96xbf16>
      %c0_33 = arith.constant 0 : index
      %c0_34 = arith.constant 0 : index
      %98 = vector.load %arg11[%c0_33, %c0_34] : memref<64x96xbf16, #tpu.memory_space<vmem>>, vector<64x96xbf16>
      tpu.vector_store %arg11[%c0_33, %c0_34], %97 {strides = array<i32>} : memref<64x96xbf16, #tpu.memory_space<vmem>>, vector<64x96xbf16>,
      %c0_35 = arith.constant 0 : index
      %c0_36 = arith.constant 0 : index
      %99 = vector.load %arg2[%c0_35, %c0_36] : memref<64x32xf32, #tpu.memory_space<vmem>>, vector<64x32xf32>
      %100 = arith.truncf %99 : vector<64x32xf32> to vector<64x32xbf16>
      %c0_37 = arith.constant 0 : index
      %c0_38 = arith.constant 0 : index
      %101 = vector.load %arg4[%c0_37, %c0_38] : memref<32x96xbf16, #tpu.memory_space<vmem>>, vector<32x96xbf16>
      %cst_39 = arith.constant dense<0.000000e+00> : vector<64x96xf32>
      %102 = tpu.matmul %100, %101, %cst_39 {dimension_numbers = #tpu.dot_dimension_numbers<[1], [0], [0], [1], [0, 0, 1, 1], [], []>} : vector<64x32xbf16>, vector<32x96xbf16>, vector<64x96xf32> -> vector<64x96xf32>
      %103 = arith.truncf %102 : vector<64x96xf32> to vector<64x96xbf16>
      %c0_40 = arith.constant 0 : index
      %c0_41 = arith.constant 0 : index
      %104 = vector.load %arg12[%c0_40, %c0_41] : memref<64x96xbf16, #tpu.memory_space<vmem>>, vector<64x96xbf16>
      tpu.vector_store %arg12[%c0_40, %c0_41], %103 {strides = array<i32>} : memref<64x96xbf16, #tpu.memory_space<vmem>>, vector<64x96xbf16>,
    } else {
    }
    %c0 = arith.constant 0 : index
    %c0_1 = arith.constant 0 : index
    %3 = vector.load %arg11[%c0, %c0_1] : memref<64x96xbf16, #tpu.memory_space<vmem>>, vector<64x96xbf16>
    %c0_2 = arith.constant 0 : index
    %c0_3 = arith.constant 0 : index
    %4 = vector.load %arg12[%c0_2, %c0_3] : memref<64x96xbf16, #tpu.memory_space<vmem>>, vector<64x96xbf16>
    %5 = vector.extract_strided_slice %3 {offsets = [0, 0], sizes = [64, 32], strides = [1, 1]} : vector<64x96xbf16> to vector<64x32xbf16>
    %6 = vector.extract_strided_slice %4 {offsets = [0, 0], sizes = [64, 32], strides = [1, 1]} : vector<64x96xbf16> to vector<64x32xbf16>
    %7 = tpu.concatenate %5, %6 in 1 : vector<64x32xbf16>, vector<64x32xbf16> -> vector<64x64xbf16>
    %c0_4 = arith.constant 0 : index
    %c0_5 = arith.constant 0 : index
    %c0_6 = arith.constant 0 : index
    %8 = vector.load %arg3[%c0_4, %c0_5, %c0_6] : memref<3x32x64xbf16, #tpu.memory_space<vmem>>, vector<1x32x64xbf16>
    %9 = vector.shape_cast %8 : vector<1x32x64xbf16> to vector<32x64xbf16>
    %cst = arith.constant dense<0.000000e+00> : vector<32x64xf32>
    %10 = tpu.matmul %9, %7, %cst {dimension_numbers = #tpu.dot_dimension_numbers<[1], [0], [0], [1], [0, 0, 1, 1], [], []>} : vector<32x64xbf16>, vector<64x64xbf16>, vector<32x64xf32> -> vector<32x64xf32>
    %11 = vector.extract_strided_slice %3 {offsets = [0, 32], sizes = [64, 32], strides = [1, 1]} : vector<64x96xbf16> to vector<64x32xbf16>
    %12 = vector.extract_strided_slice %4 {offsets = [0, 32], sizes = [64, 32], strides = [1, 1]} : vector<64x96xbf16> to vector<64x32xbf16>
    %13 = tpu.concatenate %11, %12 in 1 : vector<64x32xbf16>, vector<64x32xbf16> -> vector<64x64xbf16>
    %c1 = arith.constant 1 : index
    %c0_7 = arith.constant 0 : index
    %c0_8 = arith.constant 0 : index
    %14 = vector.load %arg3[%c1, %c0_7, %c0_8] : memref<3x32x64xbf16, #tpu.memory_space<vmem>>, vector<1x32x64xbf16>
    %15 = vector.shape_cast %14 : vector<1x32x64xbf16> to vector<32x64xbf16>
    %cst_9 = arith.constant dense<0.000000e+00> : vector<32x64xf32>
    %16 = tpu.matmul %15, %13, %cst_9 {dimension_numbers = #tpu.dot_dimension_numbers<[1], [0], [0], [1], [0, 0, 1, 1], [], []>} : vector<32x64xbf16>, vector<64x64xbf16>, vector<32x64xf32> -> vector<32x64xf32>
    %17 = vector.extract_strided_slice %3 {offsets = [0, 64], sizes = [64, 32], strides = [1, 1]} : vector<64x96xbf16> to vector<64x32xbf16>
    %18 = vector.extract_strided_slice %4 {offsets = [0, 64], sizes = [64, 32], strides = [1, 1]} : vector<64x96xbf16> to vector<64x32xbf16>
    %19 = tpu.concatenate %17, %18 in 1 : vector<64x32xbf16>, vector<64x32xbf16> -> vector<64x64xbf16>
    %c2 = arith.constant 2 : index
    %c0_10 = arith.constant 0 : index
    %c0_11 = arith.constant 0 : index
    %20 = vector.load %arg3[%c2, %c0_10, %c0_11] : memref<3x32x64xbf16, #tpu.memory_space<vmem>>, vector<1x32x64xbf16>
    %21 = vector.shape_cast %20 : vector<1x32x64xbf16> to vector<32x64xbf16>
    %cst_12 = arith.constant dense<0.000000e+00> : vector<32x64xf32>
    %22 = tpu.matmul %21, %19, %cst_12 {dimension_numbers = #tpu.dot_dimension_numbers<[1], [0], [0], [1], [0, 0, 1, 1], [], []>} : vector<32x64xbf16>, vector<64x64xbf16>, vector<32x64xf32> -> vector<32x64xf32>
    %23 = tpu.concatenate %10, %16, %22 in 1 : vector<32x64xf32>, vector<32x64xf32>, vector<32x64xf32> -> vector<32x192xf32>
    %c0_13 = arith.constant 0 : index
    %c0_14 = arith.constant 0 : index
    %24 = vector.load %arg5[%c0_13, %c0_14] : memref<1x192xf32, #tpu.memory_space<vmem>>, vector<1x192xf32>
    %25 = vector.broadcast %24 : vector<1x192xf32> to vector<32x192xf32>
    %26 = arith.addf %23, %25 : vector<32x192xf32>
    %cst_15 = arith.constant 0.000000e+00 : f32
    %27 = vector.broadcast %cst_15 : f32 to vector<32x192xf32>
    %28 = arith.cmpf oge, %26, %27 : vector<32x192xf32>
    %c0_16 = arith.constant 0 : index
    %c0_17 = arith.constant 0 : index
    %29 = vector.load %arg6[%c0_16, %c0_17] : memref<1x192xf32, #tpu.memory_space<vmem>>, vector<1x192xf32>
    %30 = vector.broadcast %29 : vector<1x192xf32> to vector<32x192xf32>
    %31 = arith.mulf %30, %26 : vector<32x192xf32>
    %32 = arith.select %28, %26, %31 : vector<32x192xi1>, vector<32x192xf32>
    %c0_18 = arith.constant 0 : index
    %c0_19 = arith.constant 0 : index
    %33 = vector.load %arg7[%c0_18, %c0_19] : memref<192x6xf32, #tpu.memory_space<vmem>>, vector<192x6xf32>
    %cst_20 = arith.constant dense<0.000000e+00> : vector<32x6xf32>
    %34 = tpu.matmul %32, %33, %cst_20 {dimension_numbers = #tpu.dot_dimension_numbers<[1], [0], [0], [1], [0, 0, 1, 1], [], []>} : vector<32x192xf32>, vector<192x6xf32>, vector<32x6xf32> -> vector<32x6xf32>
    %35 = math.tanh %34 : vector<32x6xf32>
    %36 = vector.extract_strided_slice %35 {offsets = [0, 0], sizes = [32, 3], strides = [1, 1]} : vector<32x6xf32> to vector<32x3xf32>
    %cst_21 = arith.constant dense<0xFF800000> : vector<32xf32>
    %37 = vector.multi_reduction <maximumf>, %36, %cst_21 [1] : vector<32x3xf32> to vector<32xf32>
    %38 = vector.shape_cast %37 : vector<32xf32> to vector<32x1xf32>
    %39 = vector.broadcast %38 : vector<32x1xf32> to vector<32x3xf32>
    %40 = arith.subf %36, %39 : vector<32x3xf32>
    %41 = math.exp %40 : vector<32x3xf32>
    %cst_22 = arith.constant dense<0.000000e+00> : vector<32xf32>
    %42 = vector.multi_reduction <add>, %41, %cst_22 [1] : vector<32x3xf32> to vector<32xf32>
    %43 = vector.shape_cast %42 : vector<32xf32> to vector<32x1xf32>
    %44 = vector.broadcast %43 : vector<32x1xf32> to vector<32x3xf32>
    %45 = arith.divf %41, %44 : vector<32x3xf32>
    %46 = vector.extract_strided_slice %35 {offsets = [0, 3], sizes = [32, 3], strides = [1, 1]} : vector<32x6xf32> to vector<32x3xf32>
    %cst_23 = arith.constant dense<0xFF800000> : vector<32xf32>
    %47 = vector.multi_reduction <maximumf>, %46, %cst_23 [1] : vector<32x3xf32> to vector<32xf32>
    %48 = vector.shape_cast %47 : vector<32xf32> to vector<32x1xf32>
    %49 = vector.broadcast %48 : vector<32x1xf32> to vector<32x3xf32>
    %50 = arith.subf %46, %49 : vector<32x3xf32>
    %51 = math.exp %50 : vector<32x3xf32>
    %cst_24 = arith.constant dense<0.000000e+00> : vector<32xf32>
    %52 = vector.multi_reduction <add>, %51, %cst_24 [1] : vector<32x3xf32> to vector<32xf32>
    %53 = vector.shape_cast %52 : vector<32xf32> to vector<32x1xf32>
    %54 = vector.broadcast %53 : vector<32x1xf32> to vector<32x3xf32>
    %55 = arith.divf %51, %54 : vector<32x3xf32>
    %56 = vector.extract_strided_slice %45 {offsets = [0, 0], sizes = [32, 1], strides = [1, 1]} : vector<32x3xf32> to vector<32x1xf32>
    %57 = vector.extract_strided_slice %32 {offsets = [0, 0], sizes = [32, 32], strides = [1, 1]} : vector<32x192xf32> to vector<32x32xf32>
    %58 = vector.broadcast %56 : vector<32x1xf32> to vector<32x32xf32>
    %59 = arith.mulf %58, %57 : vector<32x32xf32>
    %60 = vector.extract_strided_slice %55 {offsets = [0, 0], sizes = [32, 1], strides = [1, 1]} : vector<32x3xf32> to vector<32x1xf32>
    %61 = vector.extract_strided_slice %32 {offsets = [0, 32], sizes = [32, 32], strides = [1, 1]} : vector<32x192xf32> to vector<32x32xf32>
    %62 = vector.broadcast %60 : vector<32x1xf32> to vector<32x32xf32>
    %63 = arith.mulf %62, %61 : vector<32x32xf32>
    %64 = vector.extract_strided_slice %45 {offsets = [0, 1], sizes = [32, 1], strides = [1, 1]} : vector<32x3xf32> to vector<32x1xf32>
    %65 = vector.extract_strided_slice %32 {offsets = [0, 64], sizes = [32, 32], strides = [1, 1]} : vector<32x192xf32> to vector<32x32xf32>
    %66 = vector.broadcast %64 : vector<32x1xf32> to vector<32x32xf32>
    %67 = arith.mulf %66, %65 : vector<32x32xf32>
    %68 = arith.addf %59, %67 : vector<32x32xf32>
    %69 = vector.extract_strided_slice %55 {offsets = [0, 1], sizes = [32, 1], strides = [1, 1]} : vector<32x3xf32> to vector<32x1xf32>
    %70 = vector.extract_strided_slice %32 {offsets = [0, 96], sizes = [32, 32], strides = [1, 1]} : vector<32x192xf32> to vector<32x32xf32>
    %71 = vector.broadcast %69 : vector<32x1xf32> to vector<32x32xf32>
    %72 = arith.mulf %71, %70 : vector<32x32xf32>
    %73 = arith.addf %63, %72 : vector<32x32xf32>
    %74 = vector.extract_strided_slice %45 {offsets = [0, 2], sizes = [32, 1], strides = [1, 1]} : vector<32x3xf32> to vector<32x1xf32>
    %75 = vector.extract_strided_slice %32 {offsets = [0, 128], sizes = [32, 32], strides = [1, 1]} : vector<32x192xf32> to vector<32x32xf32>
    %76 = vector.broadcast %74 : vector<32x1xf32> to vector<32x32xf32>
    %77 = arith.mulf %76, %75 : vector<32x32xf32>
    %78 = arith.addf %68, %77 : vector<32x32xf32>
    %79 = vector.extract_strided_slice %55 {offsets = [0, 2], sizes = [32, 1], strides = [1, 1]} : vector<32x3xf32> to vector<32x1xf32>
    %80 = vector.extract_strided_slice %32 {offsets = [0, 160], sizes = [32, 32], strides = [1, 1]} : vector<32x192xf32> to vector<32x32xf32>
    %81 = vector.broadcast %79 : vector<32x1xf32> to vector<32x32xf32>
    %82 = arith.mulf %81, %80 : vector<32x32xf32>
    %83 = arith.addf %73, %82 : vector<32x32xf32>
    %c32_i32 = arith.constant 32 : i32
    %84 = arith.muli %arg0, %c32_i32 : i32
    %85 = tpu.assume_multiple %84, 32 : i32
    %86 = arith.index_cast %85 : i32 to index
    %c0_25 = arith.constant 0 : index
    %87 = vector.load %arg13[%86, %c0_25] : memref<64x32xf32, #tpu.memory_space<vmem>>, vector<32x32xf32>
    tpu.vector_store %arg13[%86, %c0_25], %78 {strides = array<i32>} : memref<64x32xf32, #tpu.memory_space<vmem>>, vector<32x32xf32>,
    %88 = arith.index_cast %85 : i32 to index
    %c0_26 = arith.constant 0 : index
    %89 = vector.load %arg14[%88, %c0_26] : memref<64x32xf32, #tpu.memory_space<vmem>>, vector<32x32xf32>
    tpu.vector_store %arg14[%88, %c0_26], %83 {strides = array<i32>} : memref<64x32xf32, #tpu.memory_space<vmem>>, vector<32x32xf32>,
    %c1_i32 = arith.constant 1 : i32
    %90 = arith.cmpi eq, %arg0, %c1_i32 : i32
    %91 = arith.extui %90 : i1 to i32
    %c0_i32_27 = arith.constant 0 : i32
    %92 = arith.cmpi ne, %91, %c0_i32_27 : i32
    scf.if %92 {
      %c0_28 = arith.constant 0 : index
      %c0_29 = arith.constant 0 : index
      %93 = vector.load %arg13[%c0_28, %c0_29] : memref<64x32xf32, #tpu.memory_space<vmem>>, vector<64x32xf32>
      %cst_30 = arith.constant dense<0.000000e+00> : vector<32xf32>
      %94 = vector.multi_reduction <add>, %93, %cst_30 [0] : vector<64x32xf32> to vector<32xf32>
      %95 = vector.shape_cast %94 : vector<32xf32> to vector<1x32xf32>
      %cst_31 = arith.constant 6.400000e+01 : f32
      %96 = vector.broadcast %cst_31 : f32 to vector<1x32xf32>
      %97 = arith.divf %95, %96 : vector<1x32xf32>
      %98 = arith.negf %97 : vector<1x32xf32>
      %99 = math.exp %98 : vector<1x32xf32>
      %cst_32 = arith.constant 1.000000e+00 : f32
      %100 = vector.broadcast %cst_32 : f32 to vector<1x32xf32>
      %101 = arith.addf %100, %99 : vector<1x32xf32>
      %102 = arith.divf %100, %101 : vector<1x32xf32>
      %c0_33 = arith.constant 0 : index
      %c0_34 = arith.constant 0 : index
      %103 = vector.load %arg8[%c0_33, %c0_34] : memref<32x32xf32, #tpu.memory_space<vmem>>, vector<32x32xf32>
      %cst_35 = arith.constant dense<0.000000e+00> : vector<1x32xf32>
      %104 = tpu.matmul %102, %103, %cst_35 {dimension_numbers = #tpu.dot_dimension_numbers<[1], [1], [0], [0], [0, 0, 1, 0], [], []>} : vector<1x32xf32>, vector<32x32xf32>, vector<1x32xf32> -> vector<1x32xf32>
      %c0_36 = arith.constant 0 : index
      %c0_37 = arith.constant 0 : index
      %105 = vector.load %arg14[%c0_36, %c0_37] : memref<64x32xf32, #tpu.memory_space<vmem>>, vector<64x32xf32>
      %106 = tpu.concatenate %93, %105 in 0 : vector<64x32xf32>, vector<64x32xf32> -> vector<128x32xf32>
      %cst_38 = arith.constant dense<0.000000e+00> : vector<1x128xf32>
      %107 = tpu.matmul %104, %106, %cst_38 {dimension_numbers = #tpu.dot_dimension_numbers<[1], [1], [0], [0], [0, 0, 1, 0], [], []>} : vector<1x32xf32>, vector<128x32xf32>, vector<1x128xf32> -> vector<1x128xf32>
      %c0_39 = arith.constant 0 : index
      %c0_40 = arith.constant 0 : index
      %108 = vector.load %arg9[%c0_39, %c0_40] : memref<1x1xf32, #tpu.memory_space<vmem>>, vector<1x1xf32>
      %109 = vector.broadcast %108 : vector<1x1xf32> to vector<1x128xf32>
      %110 = arith.addf %107, %109 : vector<1x128xf32>
      %c0_41 = arith.constant 0 : index
      %c0_42 = arith.constant 0 : index
      %111 = vector.load %arg10[%c0_41, %c0_42] : memref<1x128xf32, #tpu.memory_space<vmem>>, vector<1x128xf32>
      tpu.vector_store %arg10[%c0_41, %c0_42], %110 {strides = array<i32>} : memref<1x128xf32, #tpu.memory_space<vmem>>, vector<1x128xf32>,
    } else {
    }
    return
  }
  func.func @transform_0(%arg0: i32) -> (i32, i32) {
    %c0_i32 = arith.constant 0 : i32
    %c0_i32_0 = arith.constant 0 : i32
    %c0_i32_1 = arith.constant 0 : i32
    return %c0_i32, %c0_i32_0 : i32, i32
  }
  func.func @transform_1(%arg0: i32) -> (i32, i32) {
    %c0_i32 = arith.constant 0 : i32
    %c0_i32_0 = arith.constant 0 : i32
    %c0_i32_1 = arith.constant 0 : i32
    return %c0_i32, %c0_i32_0 : i32, i32
  }
  func.func @transform_2(%arg0: i32) -> (i32, i32, i32) {
    %c0_i32 = arith.constant 0 : i32
    %c0_i32_0 = arith.constant 0 : i32
    %c0_i32_1 = arith.constant 0 : i32
    return %c0_i32, %arg0, %c0_i32_0 : i32, i32, i32
  }
  func.func @transform_3(%arg0: i32) -> (i32, i32) {
    %c0_i32 = arith.constant 0 : i32
    %c0_i32_0 = arith.constant 0 : i32
    %c0_i32_1 = arith.constant 0 : i32
    return %c0_i32, %c0_i32_0 : i32, i32
  }
  func.func @transform_4(%arg0: i32) -> (i32, i32) {
    %c0_i32 = arith.constant 0 : i32
    %c0_i32_0 = arith.constant 0 : i32
    %c0_i32_1 = arith.constant 0 : i32
    return %c0_i32, %c0_i32_0 : i32, i32
  }
  func.func @transform_5(%arg0: i32) -> (i32, i32) {
    %c0_i32 = arith.constant 0 : i32
    %c0_i32_0 = arith.constant 0 : i32
    %c0_i32_1 = arith.constant 0 : i32
    return %c0_i32, %c0_i32_0 : i32, i32
  }
  func.func @transform_6(%arg0: i32) -> (i32, i32) {
    %c0_i32 = arith.constant 0 : i32
    %c0_i32_0 = arith.constant 0 : i32
    %c0_i32_1 = arith.constant 0 : i32
    return %c0_i32, %c0_i32_0 : i32, i32
  }
  func.func @transform_7(%arg0: i32) -> (i32, i32) {
    %c0_i32 = arith.constant 0 : i32
    %c0_i32_0 = arith.constant 0 : i32
    %c0_i32_1 = arith.constant 0 : i32
    return %c0_i32, %c0_i32_0 : i32, i32
  }
  func.func @transform_8(%arg0: i32) -> (i32, i32) {
    %c0_i32 = arith.constant 0 : i32
    %c0_i32_0 = arith.constant 0 : i32
    %c0_i32_1 = arith.constant 0 : i32
    return %c0_i32, %c0_i32_0 : i32, i32
  }
  func.func @transform_9(%arg0: i32) -> (i32, i32) {
    %c0_i32 = arith.constant 0 : i32
    %c0_i32_0 = arith.constant 0 : i32
    %c0_i32_1 = arith.constant 0 : i32
    return %c0_i32, %c0_i32_0 : i32, i32
  }
}

</mosaic_0001>

<llo_original>
// kernel: tpu_custom_call.1
$region0: #{tpu_custom_call.1}
  #allocation0 [shape = 'u32[]', space=smem, size = 0x4, offset = 0x4, fixed_abs, tag = 'smem constant byte address 0x4 - core index']
  #allocation1 [shape = 'u32[144,128]{1,0:T(1,128)}', space=vmem, size = 0x12000, scoped, tag = 'internal scratch']
  #allocation2 [shape = 'bf16[64,96]{1,0:T(16,128)(2,1)}', space=vmem, size = 0x4000, scoped, tag = 'scratch operand']
  #allocation3 [shape = 'bf16[64,96]{1,0:T(16,128)(2,1)}', space=vmem, size = 0x4000, scoped, tag = 'scratch operand']
  #allocation4 [shape = 'f32[64,32]{1,0:T(8,128)}', space=vmem, size = 0x8000, scoped, tag = 'scratch operand']
  #allocation5 [shape = 'f32[64,32]{1,0:T(8,128)}', space=vmem, size = 0x8000, scoped, tag = 'scratch operand']
  #allocation6 [shape = 'f32[1,1]{1,0:T(1,128)S(1)}', space=vmem, size = 0x200, scoped, tag = 'scoped memory for tpu_custom_call.1']
  %s0 = inlined_call_operand.vmem [shape: f32[64,32], index: 0, kind: input, shape index: {}]
  %s1 = inlined_call_operand.vmem [shape: f32[64,32], index: 1, kind: input, shape index: {}]
  %s2 = inlined_call_operand.vmem [shape: bf16[3,64,64], index: 2, kind: input, shape index: {}]
  %s3 = inlined_call_operand.vmem [shape: bf16[32,96], index: 3, kind: input, shape index: {}]
  %s4 = inlined_call_operand.vmem [shape: f32[1,192], index: 4, kind: input, shape index: {}]
  %s5 = inlined_call_operand.vmem [shape: f32[1,192], index: 5, kind: input, shape index: {}]
  %s6 = inlined_call_operand.vmem [shape: f32[192,6], index: 6, kind: input, shape index: {}]
  %s7 = inlined_call_operand.vmem [shape: f32[32,32], index: 7, kind: input, shape index: {}]
  %s8 = inlined_call_operand.<no memory space> [shape: f32[1,1], index: 8, kind: input, shape index: {}]
  %s9 = inlined_call_operand.hbm [shape: f32[1,128], index: 9, kind: output, shape index: {}]
  %s10 = sld [smem:[#allocation0]]
  $region118: #{tpu_custom_call.1} parent=0
    _
  %s12 = ssub.s32 1, %s10
  %s13 = scalar_select 0, %s12, %s10
  %v14 = vstv %s8
  %15 = vst [vmem:[#allocation6] sm:$0x1] %v14
  $region1: #{tpu_custom_call.1} parent=0
    #allocation7 [shape = 'u8[49152]{0}', space=vmem, size = 0xc000, scoped, tag = 'input window, operand 2']
    #allocation8 [shape = 'u8[512]{0}', space=vmem, size = 0x400, scoped, tag = 'output window, operand 0, single buffered']
    #allocation9 [shape = 's32[2]{0}', space=sflag, size = 0x8, scoped, tag = 'scoped memory for tpu_custom_call.1']
    %16 = vsyncpa [#allocation9], 0
    loop: start=0, step=1, limit=4
    $region2: #{tpu_custom_call.1} parent=1 // loop_pre_header
      _
    $region3: #{tpu_custom_call.1} parent=1 // loop_header
      %s18 = sphi 0, %s22
      %p19 = scmp.ge.s32.totalorder %s18, 4
      %s26 = sphi 0, %s26
      %s28 = sphi 0, %s26
      %s29 = sphi 0, %s28
      %s43 = sphi 0, %s29
      %s47 = sphi 0, %s47
      %s49 = sphi 0, %s47
      %s50 = sphi 0, %s49
      %s64 = sphi 0, %s50
      %s70 = sphi 0, %s72
      %s73 = sphi 0, %s70
      %s74 = sphi 0, %s73
      %s90 = sphi 0, %s74
      %s94 = sphi 0, %s94
      %s96 = sphi 0, %s94
      %s97 = sphi 0, %s96
      %s111 = sphi 0, %s97
      %s115 = sphi 0, %s115
      %s117 = sphi 0, %s115
      %s118 = sphi 0, %s117
      %s132 = sphi 0, %s118
      %s136 = sphi 0, %s136
      %s138 = sphi 0, %s136
      %s139 = sphi 0, %s138
      %s153 = sphi 0, %s139
      %s157 = sphi 0, %s157
      %s159 = sphi 0, %s157
      %s160 = sphi 0, %s159
      %s174 = sphi 0, %s160
      %s178 = sphi 0, %s178
      %s180 = sphi 0, %s178
      %s181 = sphi 0, %s180
      %s195 = sphi 0, %s181
      %s199 = sphi 0, %s199
      %s201 = sphi 0, %s199
      %s202 = sphi 0, %s201
      %s216 = sphi 0, %s202
      %s220 = sphi 0, %s220
      %s222 = sphi 0, %s220
      %s223 = sphi 0, %s222
      %s237 = sphi 0, %s223
    $region4: #{tpu_custom_call.1} parent=1 // loop_header_branch
      %21 = sbr.rel (%p19) target = $region8
    $region5: #{tpu_custom_call.1} parent=1 // loop_body
      %s23 = ssub.s32 %s18, 1
      %s24 = ssub.s32 %s18, 2
      %s25 = sadd.s32 %s18, 1
      %s27 = sadd.s32 %s26, 1
      %p30 = scmp.eq.s32.totalorder %s18, 1
      %p31 = scmp.ne.s32.totalorder %s26, %s28
      %p32 = scmp.eq.s32.totalorder %s18, 0
      %p33 = por %p31, %p32
      %p34 = scmp.ne.s32.totalorder %s26, %s28
      %p35 = scmp.eq.s32.totalorder %s23, 1
      %p36 = por %p34, %p35
      %p37 = scmp.ne.s32.totalorder %s28, %s29
      %p38 = scmp.eq.s32.totalorder %s23, 0
      %p39 = por %p37, %p38
      %p40 = scmp.ne.s32.totalorder %s28, %s29
      %p41 = scmp.eq.s32.totalorder %s24, 1
      %p42 = por %p40, %p41
      %p44 = scmp.ne.s32.totalorder %s29, %s43
      %p45 = scmp.eq.s32.totalorder %s24, 0
      %p46 = por %p44, %p45
      %s48 = sadd.s32 %s47, 1
      %p51 = scmp.eq.s32.totalorder %s18, 1
      %p52 = scmp.ne.s32.totalorder %s47, %s49
      %p53 = scmp.eq.s32.totalorder %s18, 0
      %p54 = por %p52, %p53
      %p55 = scmp.ne.s32.totalorder %s47, %s49
      %p56 = scmp.eq.s32.totalorder %s23, 1
      %p57 = por %p55, %p56
      %p58 = scmp.ne.s32.totalorder %s49, %s50
      %p59 = scmp.eq.s32.totalorder %s23, 0
      %p60 = por %p58, %p59
      %p61 = scmp.ne.s32.totalorder %s49, %s50
      %p62 = scmp.eq.s32.totalorder %s24, 1
      %p63 = por %p61, %p62
      %p65 = scmp.ne.s32.totalorder %s50, %s64
      %p66 = scmp.eq.s32.totalorder %s24, 0
      %p67 = por %p65, %p66
      %s68 = ssub.s32 %s18, %s25
      %p69 = scmp.eq.s32.totalorder %s68, 0
      %s71 = sadd.s32 %s70, 1
      %s72 = scalar_select %p69, %s70, %s71
      %p75 = pneg %p69
      %p76 = scmp.eq.s32.totalorder %s18, 1
      %p77 = por %p75, %p76
      %p78 = scmp.ne.s32.totalorder %s70, %s73
      %p79 = scmp.eq.s32.totalorder %s18, 0
      %p80 = por %p78, %p79
      %p81 = scmp.ne.s32.totalorder %s70, %s73
      %p82 = scmp.eq.s32.totalorder %s23, 1
      %p83 = por %p81, %p82
      %p84 = scmp.ne.s32.totalorder %s73, %s74
      %p85 = scmp.eq.s32.totalorder %s23, 0
      %p86 = por %p84, %p85
      %p87 = scmp.ne.s32.totalorder %s73, %s74
      %p88 = scmp.eq.s32.totalorder %s24, 1
      %p89 = por %p87, %p88
      %p91 = scmp.ne.s32.totalorder %s74, %s90
      %p92 = scmp.eq.s32.totalorder %s24, 0
      %p93 = por %p91, %p92
      %s95 = sadd.s32 %s94, 1
      %p98 = scmp.eq.s32.totalorder %s18, 1
      %p99 = scmp.ne.s32.totalorder %s94, %s96
      %p100 = scmp.eq.s32.totalorder %s18, 0
      %p101 = por %p99, %p100
      %p102 = scmp.ne.s32.totalorder %s94, %s96
      %p103 = scmp.eq.s32.totalorder %s23, 1
      %p104 = por %p102, %p103
      %p105 = scmp.ne.s32.totalorder %s96, %s97
      %p106 = scmp.eq.s32.totalorder %s23, 0
      %p107 = por %p105, %p106
      %p108 = scmp.ne.s32.totalorder %s96, %s97
      %p109 = scmp.eq.s32.totalorder %s24, 1
      %p110 = por %p108, %p109
      %p112 = scmp.ne.s32.totalorder %s97, %s111
      %p113 = scmp.eq.s32.totalorder %s24, 0
      %p114 = por %p112, %p113
      %s116 = sadd.s32 %s115, 1
      %p119 = scmp.eq.s32.totalorder %s18, 1
      %p120 = scmp.ne.s32.totalorder %s115, %s117
      %p121 = scmp.eq.s32.totalorder %s18, 0
      %p122 = por %p120, %p121
      %p123 = scmp.ne.s32.totalorder %s115, %s117
      %p124 = scmp.eq.s32.totalorder %s23, 1
      %p125 = por %p123, %p124
      %p126 = scmp.ne.s32.totalorder %s117, %s118
      %p127 = scmp.eq.s32.totalorder %s23, 0
      %p128 = por %p126, %p127
      %p129 = scmp.ne.s32.totalorder %s117, %s118
      %p130 = scmp.eq.s32.totalorder %s24, 1
      %p131 = por %p129, %p130
      %p133 = scmp.ne.s32.totalorder %s118, %s132
      %p134 = scmp.eq.s32.totalorder %s24, 0
      %p135 = por %p133, %p134
      %s137 = sadd.s32 %s136, 1
      %p140 = scmp.eq.s32.totalorder %s18, 1
      %p141 = scmp.ne.s32.totalorder %s136, %s138
      %p142 = scmp.eq.s32.totalorder %s18, 0
      %p143 = por %p141, %p142
      %p144 = scmp.ne.s32.totalorder %s136, %s138
      %p145 = scmp.eq.s32.totalorder %s23, 1
      %p146 = por %p144, %p145
      %p147 = scmp.ne.s32.totalorder %s138, %s139
      %p148 = scmp.eq.s32.totalorder %s23, 0
      %p149 = por %p147, %p148
      %p150 = scmp.ne.s32.totalorder %s138, %s139
      %p151 = scmp.eq.s32.totalorder %s24, 1
      %p152 = por %p150, %p151
      %p154 = scmp.ne.s32.totalorder %s139, %s153
      %p155 = scmp.eq.s32.totalorder %s24, 0
      %p156 = por %p154, %p155
      %s158 = sadd.s32 %s157, 1
      %p161 = scmp.eq.s32.totalorder %s18, 1
      %p162 = scmp.ne.s32.totalorder %s157, %s159
      %p163 = scmp.eq.s32.totalorder %s18, 0
      %p164 = por %p162, %p163
      %p165 = scmp.ne.s32.totalorder %s157, %s159
      %p166 = scmp.eq.s32.totalorder %s23, 1
      %p167 = por %p165, %p166
      %p168 = scmp.ne.s32.totalorder %s159, %s160
      %p169 = scmp.eq.s32.totalorder %s23, 0
      %p170 = por %p168, %p169
      %p171 = scmp.ne.s32.totalorder %s159, %s160
      %p172 = scmp.eq.s32.totalorder %s24, 1
      %p173 = por %p171, %p172
      %p175 = scmp.ne.s32.totalorder %s160, %s174
      %p176 = scmp.eq.s32.totalorder %s24, 0
      %p177 = por %p175, %p176
      %s179 = sadd.s32 %s178, 1
      %p182 = scmp.eq.s32.totalorder %s18, 1
      %p183 = scmp.ne.s32.totalorder %s178, %s180
      %p184 = scmp.eq.s32.totalorder %s18, 0
      %p185 = por %p183, %p184
      %p186 = scmp.ne.s32.totalorder %s178, %s180
      %p187 = scmp.eq.s32.totalorder %s23, 1
      %p188 = por %p186, %p187
      %p189 = scmp.ne.s32.totalorder %s180, %s181
      %p190 = scmp.eq.s32.totalorder %s23, 0
      %p191 = por %p189, %p190
      %p192 = scmp.ne.s32.totalorder %s180, %s181
      %p193 = scmp.eq.s32.totalorder %s24, 1
      %p194 = por %p192, %p193
      %p196 = scmp.ne.s32.totalorder %s181, %s195
      %p197 = scmp.eq.s32.totalorder %s24, 0
      %p198 = por %p196, %p197
      %s200 = sadd.s32 %s199, 1
      %p203 = scmp.eq.s32.totalorder %s18, 1
      %p204 = scmp.ne.s32.totalorder %s199, %s201
      %p205 = scmp.eq.s32.totalorder %s18, 0
      %p206 = por %p204, %p205
      %p207 = scmp.ne.s32.totalorder %s199, %s201
      %p208 = scmp.eq.s32.totalorder %s23, 1
      %p209 = por %p207, %p208
      %p210 = scmp.ne.s32.totalorder %s201, %s202
      %p211 = scmp.eq.s32.totalorder %s23, 0
      %p212 = por %p210, %p211
      %p213 = scmp.ne.s32.totalorder %s201, %s202
      %p214 = scmp.eq.s32.totalorder %s24, 1
      %p215 = por %p213, %p214
      %p217 = scmp.ne.s32.totalorder %s202, %s216
      %p218 = scmp.eq.s32.totalorder %s24, 0
      %p219 = por %p217, %p218
      %s221 = sadd.s32 %s220, 1
      %p224 = scmp.eq.s32.totalorder %s18, 1
      %p225 = scmp.ne.s32.totalorder %s220, %s222
      %p226 = scmp.eq.s32.totalorder %s18, 0
      %p227 = por %p225, %p226
      %p228 = scmp.ne.s32.totalorder %s220, %s222
      %p229 = scmp.eq.s32.totalorder %s23, 1
      %p230 = por %p228, %p229
      %p231 = scmp.ne.s32.totalorder %s222, %s223
      %p232 = scmp.eq.s32.totalorder %s23, 0
      %p233 = por %p231, %p232
      %p234 = scmp.ne.s32.totalorder %s222, %s223
      %p235 = scmp.eq.s32.totalorder %s24, 1
      %p236 = por %p234, %p235
      %p238 = scmp.ne.s32.totalorder %s223, %s237
      %p239 = scmp.eq.s32.totalorder %s24, 0
      %p240 = por %p238, %p239
      %p241 = scmp.le.s32.totalorder 1, %s18
      %p242 = scmp.lt.s32.totalorder %s18, 3
      %p243 = pnand %p241, %p242
      %p244 = pneg %p243
      // Predicated region
      $region9: #{tpu_custom_call.1} parent=5 // pred_check
        _
      $region10: #{tpu_custom_call.1} parent=5 // pred_check_branch
        %246 = sbr.rel (%p243) target = $region12
      $region11: #{tpu_custom_call.1} parent=5 // pred_region
        %s247 = ssub.s32 %s18, 1
        // Predicated region
        $region13: #{tpu_custom_call.1} parent=11 // pred_check
          %p248 = pneg %p39
        $region14: #{tpu_custom_call.1} parent=11 // pred_check_branch
          %250 = sbr.rel (%p248) target = $region16
        $region15: #{tpu_custom_call.1} parent=11 // pred_region
          _
        $region16: #{tpu_custom_call.1} parent=11 // pred_fallthru
          _
        // Predicated region
        $region17: #{tpu_custom_call.1} parent=11 // pred_check
          %p251 = pneg %p60
        $region18: #{tpu_custom_call.1} parent=11 // pred_check_branch
          %253 = sbr.rel (%p251) target = $region20
        $region19: #{tpu_custom_call.1} parent=11 // pred_region
          _
        $region20: #{tpu_custom_call.1} parent=11 // pred_fallthru
          _
        // Predicated region
        $region21: #{tpu_custom_call.1} parent=11 // pred_check
          %p254 = pneg %p107
        $region22: #{tpu_custom_call.1} parent=11 // pred_check_branch
          %256 = sbr.rel (%p254) target = $region24
        $region23: #{tpu_custom_call.1} parent=11 // pred_region
          _
        $region24: #{tpu_custom_call.1} parent=11 // pred_fallthru
          _
        // Predicated region
        $region25: #{tpu_custom_call.1} parent=11 // pred_check
          %p257 = pneg %p128
        $region26: #{tpu_custom_call.1} parent=11 // pred_check_branch
          %259 = sbr.rel (%p257) target = $region28
        $region27: #{tpu_custom_call.1} parent=11 // pred_region
          _
        $region28: #{tpu_custom_call.1} parent=11 // pred_fallthru
          _
        // Predicated region
        $region29: #{tpu_custom_call.1} parent=11 // pred_check
          %p260 = pneg %p149
        $region30: #{tpu_custom_call.1} parent=11 // pred_check_branch
          %262 = sbr.rel (%p260) target = $region32
        $region31: #{tpu_custom_call.1} parent=11 // pred_region
          _
        $region32: #{tpu_custom_call.1} parent=11 // pred_fallthru
          _
        // Predicated region
        $region33: #{tpu_custom_call.1} parent=11 // pred_check
          %p263 = pneg %p170
        $region34: #{tpu_custom_call.1} parent=11 // pred_check_branch
          %265 = sbr.rel (%p263) target = $region36
        $region35: #{tpu_custom_call.1} parent=11 // pred_region
          _
        $region36: #{tpu_custom_call.1} parent=11 // pred_fallthru
          _
        // Predicated region
        $region37: #{tpu_custom_call.1} parent=11 // pred_check
          %p266 = pneg %p191
        $region38: #{tpu_custom_call.1} parent=11 // pred_check_branch
          %268 = sbr.rel (%p266) target = $region40
        $region39: #{tpu_custom_call.1} parent=11 // pred_region
          _
        $region40: #{tpu_custom_call.1} parent=11 // pred_fallthru
          _
        // Predicated region
        $region41: #{tpu_custom_call.1} parent=11 // pred_check
          %p269 = pneg %p212
        $region42: #{tpu_custom_call.1} parent=11 // pred_check_branch
          %271 = sbr.rel (%p269) target = $region44
        $region43: #{tpu_custom_call.1} parent=11 // pred_region
          _
        $region44: #{tpu_custom_call.1} parent=11 // pred_fallthru
          _
      $region12: #{tpu_custom_call.1} parent=5 // pred_fallthru
        _
      %p272 = scmp.lt.s32.totalorder %s18, 2
      // Predicated region
      $region45: #{tpu_custom_call.1} parent=5 // pred_check
        %p273 = pneg %p272
      $region46: #{tpu_custom_call.1} parent=5 // pred_check_branch
        %275 = sbr.rel (%p273) target = $region48
      $region47: #{tpu_custom_call.1} parent=5 // pred_region
        // Predicated region
        $region49: #{tpu_custom_call.1} parent=47 // pred_check
          %p276 = pneg %p80
        $region50: #{tpu_custom_call.1} parent=47 // pred_check_branch
          %278 = sbr.rel (%p276) target = $region52
        $region51: #{tpu_custom_call.1} parent=47 // pred_region
          %s279 = sand.u32 %s70, 1
          %s280 = sand.u32 %s70, 1
          %s281 = smul.addr %s280, 48
          %s282 = scalar_lea.vmem [#allocation7], %s281
          %s283 = smul.u32 4, %s18
          %s284 = smul.addr %s283, 4
          %s285 = scalar_lea.vmem %s2, %s284
          // Predicated region
          $region53: #{tpu_custom_call.1} parent=51 // pred_check
            _
          $region54: #{tpu_custom_call.1} parent=51 // pred_check_branch
            %287 = sbr.rel (0) target = $region56
          $region55: #{tpu_custom_call.1} parent=51 // pred_region
            // Predicated region
            $region57: #{tpu_custom_call.1} parent=55 // pred_check
              _
            $region58: #{tpu_custom_call.1} parent=55 // pred_check_branch
              %289 = sbr.rel target = $region60
            $region59: #{tpu_custom_call.1} parent=55 // pred_region
              // Predicated region
              $region72: #{tpu_custom_call.1} parent=59 // pred_check
                _
              $region73: #{tpu_custom_call.1} parent=59 // pred_check_branch
                %326 = sbr.rel (0) target = $region75
              $region74: #{tpu_custom_call.1} parent=59 // pred_region
                loop: start=0, step=1, limit=1
                $region76: #{tpu_custom_call.1} parent=74 // loop_pre_header
                  _
                $region77: #{tpu_custom_call.1} parent=74 // loop_header
                  %s328 = sphi 0, %s332
                  %p329 = scmp.ge.s32.totalorder %s328, 1
                  %s333 = sphi %s285, %s285
                  %s334 = sphi %s282, %s282
                $region78: #{tpu_custom_call.1} parent=74 // loop_header_branch
                  %331 = sbr.rel (%p329) target = $region82
                $region79: #{tpu_custom_call.1} parent=74 // loop_body
                  _
                $region80: #{tpu_custom_call.1} parent=74 // loop_footer
                  %s332 = sadd.s32 1, %s328
                $region81: #{tpu_custom_call.1} parent=74 // loop_footer_branch
                  %327 = sbr.rel target = $region77
                $region82: #{tpu_custom_call.1} parent=74 // loop_exit
                  _
                loop: start=0, step=1, limit=1
                $region83: #{tpu_custom_call.1} parent=74 // loop_pre_header
                  _
                $region84: #{tpu_custom_call.1} parent=74 // loop_header
                  %s337 = sphi 0, %s341
                  %p338 = scmp.ge.s32.totalorder %s337, 1
                  %s342 = sphi %s285, %s285
                  %s343 = sphi %s282, %s282
                $region85: #{tpu_custom_call.1} parent=74 // loop_header_branch
                  %340 = sbr.rel (%p338) target = $region89
                $region86: #{tpu_custom_call.1} parent=74 // loop_body
                  %v344 = vld [vmem:[%s342] sm:$0xf]
                  %345 = vst [vmem:[%s343] sm:$0xf] %v344
                  %v346 = vld [vmem:[%s342 + $0x4] sm:$0xf]
                  %347 = vst [vmem:[%s343 + $0x4] sm:$0xf] %v346
                  %v348 = vld [vmem:[%s342 + $0x8] sm:$0xf]
                  %349 = vst [vmem:[%s343 + $0x8] sm:$0xf] %v348
                  %v350 = vld [vmem:[%s342 + $0xc] sm:$0xf]
                  %351 = vst [vmem:[%s343 + $0xc] sm:$0xf] %v350
                  %v352 = vld [vmem:[%s342 + $0x20] sm:$0xf]
                  %353 = vst [vmem:[%s343 + $0x10] sm:$0xf] %v352
                  %v354 = vld [vmem:[%s342 + $0x24] sm:$0xf]
                  %355 = vst [vmem:[%s343 + $0x14] sm:$0xf] %v354
                  %v356 = vld [vmem:[%s342 + $0x28] sm:$0xf]
                  %357 = vst [vmem:[%s343 + $0x18] sm:$0xf] %v356
                  %v358 = vld [vmem:[%s342 + $0x2c] sm:$0xf]
                  %359 = vst [vmem:[%s343 + $0x1c] sm:$0xf] %v358
                  %v360 = vld [vmem:[%s342 + $0x40] sm:$0xf]
                  %361 = vst [vmem:[%s343 + $0x20] sm:$0xf] %v360
                  %v362 = vld [vmem:[%s342 + $0x44] sm:$0xf]
                  %363 = vst [vmem:[%s343 + $0x24] sm:$0xf] %v362
                  %v364 = vld [vmem:[%s342 + $0x48] sm:$0xf]
                  %365 = vst [vmem:[%s343 + $0x28] sm:$0xf] %v364
                  %v366 = vld [vmem:[%s342 + $0x4c] sm:$0xf]
                  %367 = vst [vmem:[%s343 + $0x2c] sm:$0xf] %v366
                $region87: #{tpu_custom_call.1} parent=74 // loop_footer
                  %s341 = sadd.s32 1, %s337
                $region88: #{tpu_custom_call.1} parent=74 // loop_footer_branch
                  %336 = sbr.rel target = $region84
                $region89: #{tpu_custom_call.1} parent=74 // loop_exit
                  _
              $region75: #{tpu_custom_call.1} parent=59 // pred_fallthru
                _
            $region60: #{tpu_custom_call.1} parent=55 // pred_fallthru
              _
            // Predicated region
            $region61: #{tpu_custom_call.1} parent=55 // pred_check
              _
            $region62: #{tpu_custom_call.1} parent=55 // pred_check_branch
              %291 = sbr.rel (0) target = $region64
            $region63: #{tpu_custom_call.1} parent=55 // pred_region
              loop: start=0, step=1, limit=1
              $region65: #{tpu_custom_call.1} parent=63 // loop_pre_header
                _
              $region66: #{tpu_custom_call.1} parent=63 // loop_header
                %s294 = sphi 0, %s298
                %p295 = scmp.ge.s32.totalorder %s294, 1
                %s299 = sphi %s285, %s285
                %s300 = sphi %s282, %s282
              $region67: #{tpu_custom_call.1} parent=63 // loop_header_branch
                %297 = sbr.rel (%p295) target = $region71
              $region68: #{tpu_custom_call.1} parent=63 // loop_body
                %v301 = vld [vmem:[%s299] sm:$0xf]
                %302 = vst [vmem:[%s300] sm:$0xf] %v301
                %v303 = vld [vmem:[%s299 + $0x4] sm:$0xf]
                %304 = vst [vmem:[%s300 + $0x4] sm:$0xf] %v303
                %v305 = vld [vmem:[%s299 + $0x8] sm:$0xf]
                %306 = vst [vmem:[%s300 + $0x8] sm:$0xf] %v305
                %v307 = vld [vmem:[%s299 + $0xc] sm:$0xf]
                %308 = vst [vmem:[%s300 + $0xc] sm:$0xf] %v307
                %v309 = vld [vmem:[%s299 + $0x20] sm:$0xf]
                %310 = vst [vmem:[%s300 + $0x10] sm:$0xf] %v309
                %v311 = vld [vmem:[%s299 + $0x24] sm:$0xf]
                %312 = vst [vmem:[%s300 + $0x14] sm:$0xf] %v311
                %v313 = vld [vmem:[%s299 + $0x28] sm:$0xf]
                %314 = vst [vmem:[%s300 + $0x18] sm:$0xf] %v313
                %v315 = vld [vmem:[%s299 + $0x2c] sm:$0xf]
                %316 = vst [vmem:[%s300 + $0x1c] sm:$0xf] %v315
                %v317 = vld [vmem:[%s299 + $0x40] sm:$0xf]
                %318 = vst [vmem:[%s300 + $0x20] sm:$0xf] %v317
                %v319 = vld [vmem:[%s299 + $0x44] sm:$0xf]
                %320 = vst [vmem:[%s300 + $0x24] sm:$0xf] %v319
                %v321 = vld [vmem:[%s299 + $0x48] sm:$0xf]
                %322 = vst [vmem:[%s300 + $0x28] sm:$0xf] %v321
                %v323 = vld [vmem:[%s299 + $0x4c] sm:$0xf]
                %324 = vst [vmem:[%s300 + $0x2c] sm:$0xf] %v323
              $region69: #{tpu_custom_call.1} parent=63 // loop_footer
                %s298 = sadd.s32 1, %s294
              $region70: #{tpu_custom_call.1} parent=63 // loop_footer_branch
                %293 = sbr.rel target = $region66
              $region71: #{tpu_custom_call.1} parent=63 // loop_exit
                _
            $region64: #{tpu_custom_call.1} parent=55 // pred_fallthru
              _
          $region56: #{tpu_custom_call.1} parent=51 // pred_fallthru
            _
          %368 = vnop
        $region52: #{tpu_custom_call.1} parent=47 // pred_fallthru
          _
      $region48: #{tpu_custom_call.1} parent=5 // pred_fallthru
        _
      %p369 = scmp.le.s32.totalorder 1, %s18
      %p370 = scmp.lt.s32.totalorder %s18, 3
      %p371 = pnand %p369, %p370
      %p372 = pneg %p371
      // Predicated region
      $region90: #{tpu_custom_call.1} parent=5 // pred_check
        _
      $region91: #{tpu_custom_call.1} parent=5 // pred_check_branch
        %374 = sbr.rel (%p371) target = $region93
      $region92: #{tpu_custom_call.1} parent=5 // pred_region
        %s375 = ssub.s32 %s18, 1
        %s376 = sand.u32 %s73, 1
        %s377 = sand.u32 %s73, 1
        %s378 = smul.addr %s377, 48
        %s379 = scalar_lea.vmem [#allocation7], %s378
        // Predicated region
        $region94: #{tpu_custom_call.1} parent=92 // pred_check
          %p380 = pneg %p86
        $region95: #{tpu_custom_call.1} parent=92 // pred_check_branch
          %382 = sbr.rel (%p380) target = $region97
        $region96: #{tpu_custom_call.1} parent=92 // pred_region
          _
        $region97: #{tpu_custom_call.1} parent=92 // pred_fallthru
          _
        %p383 = pneg %p39
        %p384 = pneg %p36
        %p385 = pneg %p60
        %p386 = pneg %p57
        %s387 = sand.u32 %s73, 1
        %s388 = sand.u32 %s73, 1
        %s389 = smul.addr %s388, 48
        %s390 = scalar_lea.vmem [#allocation7], %s389
        %p391 = pneg %p86
        %p392 = pneg %p83
        %p393 = pneg %p107
        %p394 = pneg %p104
        %p395 = pneg %p128
        %p396 = pneg %p125
        %p397 = pneg %p149
        %p398 = pneg %p146
        %p399 = pneg %p170
        %p400 = pneg %p167
        %p401 = pneg %p191
        %p402 = pneg %p188
        %p403 = pneg %p212
        %p404 = pneg %p209
        %p405 = pneg %p233
        %p406 = pneg %p230
        %s407 = smul.u32 4, %s23
        %p409 = scmp.eq.s32.totalorder %s23, 0
        // Predicated region
        $region98: #{tpu_custom_call.1} parent=92 // pred_check
          %p410 = pneg %p409
        $region99: #{tpu_custom_call.1} parent=92 // pred_check_branch
          %412 = sbr.rel (%p410) target = $region101
        $region100: #{tpu_custom_call.1} parent=92 // pred_region
          %v413 = vld [vmem:[%s0] sm:$0xff]
          %v414 = vld [vmem:[%s0 + $0x8] sm:$0xff]
          %v415 = vld [vmem:[%s0 + $0x10] sm:$0xff]
          %v416 = vld [vmem:[%s0 + $0x18] sm:$0xff]
          %v417 = vld [vmem:[%s0 + $0x20] sm:$0xff]
          %v418 = vld [vmem:[%s0 + $0x28] sm:$0xff]
          %v419 = vld [vmem:[%s0 + $0x30] sm:$0xff]
          %v420 = vld [vmem:[%s0 + $0x38] sm:$0xff]
          %v421 = vpack.c.bf16 %v414, %v413
          %v422 = vpack.c.bf16 %v416, %v415
          %v423 = vpack.c.bf16 %v418, %v417
          %v424 = vpack.c.bf16 %v420, %v419
          %v425 = vld [vmem:[%s3] sm:$0xf]
          %v426 = vld [vmem:[%s3 + $0x4] sm:$0xf]
          %v427 = vld [vmem:[%s3 + $0x8] sm:$0xf]
          %v428 = vld [vmem:[%s3 + $0xc] sm:$0xf]
          %v433 = vunpack.c.l.b16 %v425
          %v434 = vunpack.c.l.b16 %v426
          %v435 = vunpack.c.l.b16 %v427
          %v436 = vunpack.c.l.b16 %v428
          %v437 = vpack.c.b16 %v434, %v433
          %v438 = vpack.c.b16 %v436, %v435
          %vm441 = vcmask 261120
          %v443 = vsel %vm441, %v421, 0
          %v446 = vsel %vm441, %v422, 0
          %v449 = vsel %vm441, %v423, 0
          %v452 = vsel %vm441, %v424, 0
          %454 = vmatprep.subr.bf16.mxu0 0
          %455 = vmatpush1.bf16.msra.mxu0 %v437
          %456 = vmatprep.subr.bf16.mxu0 0
          %457 = vmatpush1.bf16.msra.mxu0 %v438
          %458 = vmatprep.subr.bf16.mxu0 0
          %459 = vmatpush1.bf16.msra.mxu0 0
          %460 = vmatprep.subr.bf16.mxu0 0
          %461 = vmatpush1.bf16.msra.mxu0 0
          %462 = vmatprep.subr.bf16.mxu0 0
          %463 = vmatpush1.bf16.msra.mxu0 0
          %464 = vmatprep.subr.bf16.mxu0 0
          %465 = vmatpush1.bf16.msra.mxu0 0
          %466 = vmatprep.subr.bf16.mxu0 0
          %467 = vmatpush1.bf16.msra.mxu0 0
          %468 = vmatprep.subr.bf16.mxu0 0
          %469 = vmatpush1.bf16.msra.mxu0 0
          %470 = vmatprep.subr.bf16.mxu0 0
          %471 = vmatpush1.bf16.msra.mxu0 0
          %472 = vmatprep.subr.bf16.mxu0 0
          %473 = vmatpush1.bf16.msra.mxu0 0
          %474 = vmatprep.subr.bf16.mxu0 0
          %475 = vmatpush1.bf16.msra.mxu0 0
          %476 = vmatprep.subr.bf16.mxu0 0
          %477 = vmatpush1.bf16.msra.mxu0 0
          %478 = vmatprep.subr.bf16.mxu0 0
          %479 = vmatpush1.bf16.msra.mxu0 0
          %480 = vmatprep.subr.bf16.mxu0 0
          %481 = vmatpush1.bf16.msra.mxu0 0
          %482 = vmatprep.subr.bf16.mxu0 0
          %483 = vmatpush1.bf16.msra.mxu0 0
          %484 = vmatprep.subr.bf16.mxu0 0
          %485 = vmatpush1.bf16.msra.mxu0 0
          %486 = vmatprep.mubr.bf16.mxu0 0
          %487 = vmatmul.mubr.bf16.gmra.mrb[0].mxu0 %v443
          %v488 = vpop.f32.mrb[0].mxu0
          %v489 = vadd.f32 0.0, %v488
          %v490 = vpop.f32.mrb[0].mxu0
          %v491 = vpop.f32.mrb[0].mxu0
          %v492 = vadd.f32 0.0, %v491
          %v493 = vpop.f32.mrb[0].mxu0
          %494 = vmatprep.mubr.bf16.mxu0 0
          %495 = vmatmul.mubr.bf16.gmra.mrb[0].mxu0 %v446
          %v496 = vpop.f32.mrb[0].mxu0
          %v497 = vadd.f32 0.0, %v496
          %v498 = vpop.f32.mrb[0].mxu0
          %v499 = vpop.f32.mrb[0].mxu0
          %v500 = vadd.f32 0.0, %v499
          %v501 = vpop.f32.mrb[0].mxu0
          %502 = vmatprep.mubr.bf16.mxu0 0
          %503 = vmatmul.mubr.bf16.gmra.mrb[0].mxu0 %v449
          %v504 = vpop.f32.mrb[0].mxu0
          %v505 = vadd.f32 0.0, %v504
          %v506 = vpop.f32.mrb[0].mxu0
          %v507 = vpop.f32.mrb[0].mxu0
          %v508 = vadd.f32 0.0, %v507
          %v509 = vpop.f32.mrb[0].mxu0
          %510 = vmatprep.mubr.bf16.mxu0 0
          %511 = vmatmul.mubr.bf16.gmra.mrb[0].mxu0 %v452
          %v512 = vpop.f32.mrb[0].mxu0
          %v513 = vadd.f32 0.0, %v512
          %v514 = vpop.f32.mrb[0].mxu0
          %v515 = vpop.f32.mrb[0].mxu0
          %v516 = vadd.f32 0.0, %v515
          %v517 = vpop.f32.mrb[0].mxu0
          %518 = vdwg.mxu0
          %v519 = vpack.c.bf16 %v492, %v489
          %v520 = vpack.c.bf16 %v500, %v497
          %v521 = vpack.c.bf16 %v508, %v505
          %v522 = vpack.c.bf16 %v516, %v513
          %vm523 = vcmask 785408
          %524 = vst.msk [vmem:[#allocation2] sm:$0xff] %vm523, %v519
          %525 = vst.msk [vmem:[#allocation2 + $0x8] sm:$0xff] %vm523, %v520
          %526 = vst.msk [vmem:[#allocation2 + $0x10] sm:$0xff] %vm523, %v521
          %527 = vst.msk [vmem:[#allocation2 + $0x18] sm:$0xff] %vm523, %v522
          %v528 = vld [vmem:[%s1] sm:$0xff]
          %v529 = vld [vmem:[%s1 + $0x8] sm:$0xff]
          %v530 = vld [vmem:[%s1 + $0x10] sm:$0xff]
          %v531 = vld [vmem:[%s1 + $0x18] sm:$0xff]
          %v532 = vld [vmem:[%s1 + $0x20] sm:$0xff]
          %v533 = vld [vmem:[%s1 + $0x28] sm:$0xff]
          %v534 = vld [vmem:[%s1 + $0x30] sm:$0xff]
          %v535 = vld [vmem:[%s1 + $0x38] sm:$0xff]
          %v536 = vpack.c.bf16 %v529, %v528
          %v537 = vpack.c.bf16 %v531, %v530
          %v538 = vpack.c.bf16 %v533, %v532
          %v539 = vpack.c.bf16 %v535, %v534
          %v540 = vld [vmem:[%s3] sm:$0xf]
          %v541 = vld [vmem:[%s3 + $0x4] sm:$0xf]
          %v542 = vld [vmem:[%s3 + $0x8] sm:$0xf]
          %v543 = vld [vmem:[%s3 + $0xc] sm:$0xf]
          %v548 = vunpack.c.l.b16 %v540
          %v549 = vunpack.c.l.b16 %v541
          %v550 = vunpack.c.l.b16 %v542
          %v551 = vunpack.c.l.b16 %v543
          %v552 = vpack.c.b16 %v549, %v548
          %v553 = vpack.c.b16 %v551, %v550
          %v557 = vsel %vm441, %v536, 0
          %v560 = vsel %vm441, %v537, 0
          %v563 = vsel %vm441, %v538, 0
          %v566 = vsel %vm441, %v539, 0
          %568 = vmatprep.subr.bf16.mxu0 0
          %569 = vmatpush1.bf16.msra.mxu0 %v552
          %570 = vmatprep.subr.bf16.mxu0 0
          %571 = vmatpush1.bf16.msra.mxu0 %v553
          %572 = vmatprep.subr.bf16.mxu0 0
          %573 = vmatpush1.bf16.msra.mxu0 0
          %574 = vmatprep.subr.bf16.mxu0 0
          %575 = vmatpush1.bf16.msra.mxu0 0
          %576 = vmatprep.subr.bf16.mxu0 0
          %577 = vmatpush1.bf16.msra.mxu0 0
          %578 = vmatprep.subr.bf16.mxu0 0
          %579 = vmatpush1.bf16.msra.mxu0 0
          %580 = vmatprep.subr.bf16.mxu0 0
          %581 = vmatpush1.bf16.msra.mxu0 0
          %582 = vmatprep.subr.bf16.mxu0 0
          %583 = vmatpush1.bf16.msra.mxu0 0
          %584 = vmatprep.subr.bf16.mxu0 0
          %585 = vmatpush1.bf16.msra.mxu0 0
          %586 = vmatprep.subr.bf16.mxu0 0
          %587 = vmatpush1.bf16.msra.mxu0 0
          %588 = vmatprep.subr.bf16.mxu0 0
          %589 = vmatpush1.bf16.msra.mxu0 0
          %590 = vmatprep.subr.bf16.mxu0 0
          %591 = vmatpush1.bf16.msra.mxu0 0
          %592 = vmatprep.subr.bf16.mxu0 0
          %593 = vmatpush1.bf16.msra.mxu0 0
          %594 = vmatprep.subr.bf16.mxu0 0
          %595 = vmatpush1.bf16.msra.mxu0 0
          %596 = vmatprep.subr.bf16.mxu0 0
          %597 = vmatpush1.bf16.msra.mxu0 0
          %598 = vmatprep.subr.bf16.mxu0 0
          %599 = vmatpush1.bf16.msra.mxu0 0
          %600 = vmatprep.mubr.bf16.mxu0 0
          %601 = vmatmul.mubr.bf16.gmra.mrb[0].mxu0 %v557
          %v602 = vpop.f32.mrb[0].mxu0
          %v603 = vadd.f32 0.0, %v602
          %v604 = vpop.f32.mrb[0].mxu0
          %v605 = vpop.f32.mrb[0].mxu0
          %v606 = vadd.f32 0.0, %v605
          %v607 = vpop.f32.mrb[0].mxu0
          %608 = vmatprep.mubr.bf16.mxu0 0
          %609 = vmatmul.mubr.bf16.gmra.mrb[0].mxu0 %v560
          %v610 = vpop.f32.mrb[0].mxu0
          %v611 = vadd.f32 0.0, %v610
          %v612 = vpop.f32.mrb[0].mxu0
          %v613 = vpop.f32.mrb[0].mxu0
          %v614 = vadd.f32 0.0, %v613
          %v615 = vpop.f32.mrb[0].mxu0
          %616 = vmatprep.mubr.bf16.mxu0 0
          %617 = vmatmul.mubr.bf16.gmra.mrb[0].mxu0 %v563
          %v618 = vpop.f32.mrb[0].mxu0
          %v619 = vadd.f32 0.0, %v618
          %v620 = vpop.f32.mrb[0].mxu0
          %v621 = vpop.f32.mrb[0].mxu0
          %v622 = vadd.f32 0.0, %v621
          %v623 = vpop.f32.mrb[0].mxu0
          %624 = vmatprep.mubr.bf16.mxu0 0
          %625 = vmatmul.mubr.bf16.gmra.mrb[0].mxu0 %v566
          %v626 = vpop.f32.mrb[0].mxu0
          %v627 = vadd.f32 0.0, %v626
          %v628 = vpop.f32.mrb[0].mxu0
          %v629 = vpop.f32.mrb[0].mxu0
          %v630 = vadd.f32 0.0, %v629
          %v631 = vpop.f32.mrb[0].mxu0
          %632 = vdwg.mxu0
          %v633 = vpack.c.bf16 %v606, %v603
          %v634 = vpack.c.bf16 %v614, %v611
          %v635 = vpack.c.bf16 %v622, %v619
          %v636 = vpack.c.bf16 %v630, %v627
          %637 = vst.msk [vmem:[#allocation3] sm:$0xff] %vm523, %v633
          %638 = vst.msk [vmem:[#allocation3 + $0x8] sm:$0xff] %vm523, %v634
          %639 = vst.msk [vmem:[#allocation3 + $0x10] sm:$0xff] %vm523, %v635
          %640 = vst.msk [vmem:[#allocation3 + $0x18] sm:$0xff] %vm523, %v636
        $region101: #{tpu_custom_call.1} parent=92 // pred_fallthru
          _
        %v641 = vld [vmem:[#allocation2] sm:$0xff]
        %v642 = vld [vmem:[#allocation2 + $0x8] sm:$0xff]
        %v643 = vld [vmem:[#allocation2 + $0x10] sm:$0xff]
        %v644 = vld [vmem:[#allocation2 + $0x18] sm:$0xff]
        %v645 = vld [vmem:[#allocation3] sm:$0xff]
        %v646 = vld [vmem:[#allocation3 + $0x8] sm:$0xff]
        %v647 = vld [vmem:[#allocation3 + $0x10] sm:$0xff]
        %v648 = vld [vmem:[#allocation3 + $0x18] sm:$0xff]
        %653 = vrot.lane.b32.xlu0 %v645, 32
        %v654 = vpop.permute.xlu0 %653
        %655 = vrot.lane.b32.xlu0 %v646, 32
        %v656 = vpop.permute.xlu0 %655
        %657 = vrot.lane.b32.xlu0 %v647, 32
        %v658 = vpop.permute.xlu0 %657
        %659 = vrot.lane.b32.xlu0 %v648, 32
        %v660 = vpop.permute.xlu0 %659
        %vm661 = vcmask 261120
        %v664 = vsel %vm661, %v641, %v654
        %v668 = vsel %vm661, %v642, %v656
        %v672 = vsel %vm661, %v643, %v658
        %v676 = vsel %vm661, %v644, %v660
        %v678 = vld [vmem:[%s379] sm:$0xf]
        %v679 = vld [vmem:[%s379 + $0x4] sm:$0xf]
        %v680 = vld [vmem:[%s379 + $0x8] sm:$0xf]
        %v681 = vld [vmem:[%s379 + $0xc] sm:$0xf]
        %v686 = vunpack.c.l.b16 %v678
        %v687 = vunpack.c.l.b16 %v679
        %v688 = vunpack.c.l.b16 %v680
        %v689 = vunpack.c.l.b16 %v681
        %v690 = vpack.c.b16 %v687, %v686
        %v691 = vpack.c.b16 %v689, %v688
        %vm692 = vcmask 523264
        %v694 = vsel %vm692, %v690, 0
        %v697 = vsel %vm692, %v691, 0
        %699 = vmatprep.subr.bf16.mxu0 0
        %700 = vmatpush1.bf16.msra.mxu0 %v664
        %701 = vmatprep.subr.bf16.mxu0 0
        %702 = vmatpush1.bf16.msra.mxu0 %v668
        %703 = vmatprep.subr.bf16.mxu0 0
        %704 = vmatpush1.bf16.msra.mxu0 %v672
        %705 = vmatprep.subr.bf16.mxu0 0
        %706 = vmatpush1.bf16.msra.mxu0 %v676
        %707 = vmatprep.subr.bf16.mxu0 0
        %708 = vmatpush1.bf16.msra.mxu0 0
        %709 = vmatprep.subr.bf16.mxu0 0
        %710 = vmatpush1.bf16.msra.mxu0 0
        %711 = vmatprep.subr.bf16.mxu0 0
        %712 = vmatpush1.bf16.msra.mxu0 0
        %713 = vmatprep.subr.bf16.mxu0 0
        %714 = vmatpush1.bf16.msra.mxu0 0
        %715 = vmatprep.subr.bf16.mxu0 0
        %716 = vmatpush1.bf16.msra.mxu0 0
        %717 = vmatprep.subr.bf16.mxu0 0
        %718 = vmatpush1.bf16.msra.mxu0 0
        %719 = vmatprep.subr.bf16.mxu0 0
        %720 = vmatpush1.bf16.msra.mxu0 0
        %721 = vmatprep.subr.bf16.mxu0 0
        %722 = vmatpush1.bf16.msra.mxu0 0
        %723 = vmatprep.subr.bf16.mxu0 0
        %724 = vmatpush1.bf16.msra.mxu0 0
        %725 = vmatprep.subr.bf16.mxu0 0
        %726 = vmatpush1.bf16.msra.mxu0 0
        %727 = vmatprep.subr.bf16.mxu0 0
        %728 = vmatpush1.bf16.msra.mxu0 0
        %729 = vmatprep.subr.bf16.mxu0 0
        %730 = vmatpush1.bf16.msra.mxu0 0
        %731 = vmatprep.mubr.bf16.mxu0 0
        %732 = vmatmul.mubr.bf16.gmra.mrb[0].mxu0 %v694
        %v733 = vpop.f32.mrb[0].mxu0
        %v734 = vadd.f32 0.0, %v733
        %v735 = vpop.f32.mrb[0].mxu0
        %v736 = vpop.f32.mrb[0].mxu0
        %v737 = vadd.f32 0.0, %v736
        %v738 = vpop.f32.mrb[0].mxu0
        %739 = vmatprep.mubr.bf16.mxu0 0
        %740 = vmatmul.mubr.bf16.gmra.mrb[0].mxu0 %v697
        %v741 = vpop.f32.mrb[0].mxu0
        %v742 = vadd.f32 0.0, %v741
        %v743 = vpop.f32.mrb[0].mxu0
        %v744 = vpop.f32.mrb[0].mxu0
        %v745 = vadd.f32 0.0, %v744
        %v746 = vpop.f32.mrb[0].mxu0
        %747 = vdwg.mxu0
        %752 = vrot.lane.b32.xlu0 %v641, 96
        %v753 = vpop.permute.xlu0 %752
        %754 = vrot.lane.b32.xlu0 %v642, 96
        %v755 = vpop.permute.xlu0 %754
        %756 = vrot.lane.b32.xlu0 %v643, 96
        %v757 = vpop.permute.xlu0 %756
        %758 = vrot.lane.b32.xlu0 %v644, 96
        %v759 = vpop.permute.xlu0 %758
        %v762 = vsel %vm661, %v753, %v645
        %v766 = vsel %vm661, %v755, %v646
        %v770 = vsel %vm661, %v757, %v647
        %v774 = vsel %vm661, %v759, %v648
        %s776 = scalar_lea.vmem %s379, 16 [#allocation7]
        %v777 = vld [vmem:[%s776] sm:$0xf]
        %v778 = vld [vmem:[%s776 + $0x4] sm:$0xf]
        %v779 = vld [vmem:[%s776 + $0x8] sm:$0xf]
        %v780 = vld [vmem:[%s776 + $0xc] sm:$0xf]
        %v785 = vunpack.c.l.b16 %v777
        %v786 = vunpack.c.l.b16 %v778
        %v787 = vunpack.c.l.b16 %v779
        %v788 = vunpack.c.l.b16 %v780
        %v789 = vpack.c.b16 %v786, %v785
        %v790 = vpack.c.b16 %v788, %v787
        %v792 = vsel %vm692, %v789, 0
        %v795 = vsel %vm692, %v790, 0
        %797 = vmatprep.subr.bf16.mxu0 0
        %798 = vmatpush1.bf16.msra.mxu0 %v762
        %799 = vmatprep.subr.bf16.mxu0 0
        %800 = vmatpush1.bf16.msra.mxu0 %v766
        %801 = vmatprep.subr.bf16.mxu0 0
        %802 = vmatpush1.bf16.msra.mxu0 %v770
        %803 = vmatprep.subr.bf16.mxu0 0
        %804 = vmatpush1.bf16.msra.mxu0 %v774
        %805 = vmatprep.subr.bf16.mxu0 0
        %806 = vmatpush1.bf16.msra.mxu0 0
        %807 = vmatprep.subr.bf16.mxu0 0
        %808 = vmatpush1.bf16.msra.mxu0 0
        %809 = vmatprep.subr.bf16.mxu0 0
        %810 = vmatpush1.bf16.msra.mxu0 0
        %811 = vmatprep.subr.bf16.mxu0 0
        %812 = vmatpush1.bf16.msra.mxu0 0
        %813 = vmatprep.subr.bf16.mxu0 0
        %814 = vmatpush1.bf16.msra.mxu0 0
        %815 = vmatprep.subr.bf16.mxu0 0
        %816 = vmatpush1.bf16.msra.mxu0 0
        %817 = vmatprep.subr.bf16.mxu0 0
        %818 = vmatpush1.bf16.msra.mxu0 0
        %819 = vmatprep.subr.bf16.mxu0 0
        %820 = vmatpush1.bf16.msra.mxu0 0
        %821 = vmatprep.subr.bf16.mxu0 0
        %822 = vmatpush1.bf16.msra.mxu0 0
        %823 = vmatprep.subr.bf16.mxu0 0
        %824 = vmatpush1.bf16.msra.mxu0 0
        %825 = vmatprep.subr.bf16.mxu0 0
        %826 = vmatpush1.bf16.msra.mxu0 0
        %827 = vmatprep.subr.bf16.mxu0 0
        %828 = vmatpush1.bf16.msra.mxu0 0
        %829 = vmatprep.mubr.bf16.mxu0 0
        %830 = vmatmul.mubr.bf16.gmra.mrb[0].mxu0 %v792
        %v831 = vpop.f32.mrb[0].mxu0
        %v832 = vadd.f32 0.0, %v831
        %v833 = vpop.f32.mrb[0].mxu0
        %v834 = vpop.f32.mrb[0].mxu0
        %v835 = vadd.f32 0.0, %v834
        %v836 = vpop.f32.mrb[0].mxu0
        %837 = vmatprep.mubr.bf16.mxu0 0
        %838 = vmatmul.mubr.bf16.gmra.mrb[0].mxu0 %v795
        %v839 = vpop.f32.mrb[0].mxu0
        %v840 = vadd.f32 0.0, %v839
        %v841 = vpop.f32.mrb[0].mxu0
        %v842 = vpop.f32.mrb[0].mxu0
        %v843 = vadd.f32 0.0, %v842
        %v844 = vpop.f32.mrb[0].mxu0
        %845 = vdwg.mxu0
        %846 = vrot.lane.b32.xlu0 %v641, 64
        %v847 = vpop.permute.xlu0 %846
        %848 = vrot.lane.b32.xlu0 %v642, 64
        %v849 = vpop.permute.xlu0 %848
        %850 = vrot.lane.b32.xlu0 %v643, 64
        %v851 = vpop.permute.xlu0 %850
        %852 = vrot.lane.b32.xlu0 %v644, 64
        %v853 = vpop.permute.xlu0 %852
        %854 = vrot.lane.b32.xlu0 %v645, 96
        %v855 = vpop.permute.xlu0 %854
        %856 = vrot.lane.b32.xlu0 %v646, 96
        %v857 = vpop.permute.xlu0 %856
        %858 = vrot.lane.b32.xlu0 %v647, 96
        %v859 = vpop.permute.xlu0 %858
        %860 = vrot.lane.b32.xlu0 %v648, 96
        %v861 = vpop.permute.xlu0 %860
        %v864 = vsel %vm661, %v847, %v855
        %v868 = vsel %vm661, %v849, %v857
        %v872 = vsel %vm661, %v851, %v859
        %v876 = vsel %vm661, %v853, %v861
        %s878 = scalar_lea.vmem %s379, 32 [#allocation7]
        %v879 = vld [vmem:[%s878] sm:$0xf]
        %v880 = vld [vmem:[%s878 + $0x4] sm:$0xf]
        %v881 = vld [vmem:[%s878 + $0x8] sm:$0xf]
        %v882 = vld [vmem:[%s878 + $0xc] sm:$0xf]
        %v887 = vunpack.c.l.b16 %v879
        %v888 = vunpack.c.l.b16 %v880
        %v889 = vunpack.c.l.b16 %v881
        %v890 = vunpack.c.l.b16 %v882
        %v891 = vpack.c.b16 %v888, %v887
        %v892 = vpack.c.b16 %v890, %v889
        %v894 = vsel %vm692, %v891, 0
        %v897 = vsel %vm692, %v892, 0
        %899 = vmatprep.subr.bf16.mxu0 0
        %900 = vmatpush1.bf16.msra.mxu0 %v864
        %901 = vmatprep.subr.bf16.mxu0 0
        %902 = vmatpush1.bf16.msra.mxu0 %v868
        %903 = vmatprep.subr.bf16.mxu0 0
        %904 = vmatpush1.bf16.msra.mxu0 %v872
        %905 = vmatprep.subr.bf16.mxu0 0
        %906 = vmatpush1.bf16.msra.mxu0 %v876
        %907 = vmatprep.subr.bf16.mxu0 0
        %908 = vmatpush1.bf16.msra.mxu0 0
        %909 = vmatprep.subr.bf16.mxu0 0
        %910 = vmatpush1.bf16.msra.mxu0 0
        %911 = vmatprep.subr.bf16.mxu0 0
        %912 = vmatpush1.bf16.msra.mxu0 0
        %913 = vmatprep.subr.bf16.mxu0 0
        %914 = vmatpush1.bf16.msra.mxu0 0
        %915 = vmatprep.subr.bf16.mxu0 0
        %916 = vmatpush1.bf16.msra.mxu0 0
        %917 = vmatprep.subr.bf16.mxu0 0
        %918 = vmatpush1.bf16.msra.mxu0 0
        %919 = vmatprep.subr.bf16.mxu0 0
        %920 = vmatpush1.bf16.msra.mxu0 0
        %921 = vmatprep.subr.bf16.mxu0 0
        %922 = vmatpush1.bf16.msra.mxu0 0
        %923 = vmatprep.subr.bf16.mxu0 0
        %924 = vmatpush1.bf16.msra.mxu0 0
        %925 = vmatprep.subr.bf16.mxu0 0
        %926 = vmatpush1.bf16.msra.mxu0 0
        %927 = vmatprep.subr.bf16.mxu0 0
        %928 = vmatpush1.bf16.msra.mxu0 0
        %929 = vmatprep.subr.bf16.mxu0 0
        %930 = vmatpush1.bf16.msra.mxu0 0
        %931 = vmatprep.mubr.bf16.mxu0 0
        %932 = vmatmul.mubr.bf16.gmra.mrb[0].mxu0 %v894
        %v933 = vpop.f32.mrb[0].mxu0
        %v934 = vadd.f32 0.0, %v933
        %v935 = vpop.f32.mrb[0].mxu0
        %v936 = vpop.f32.mrb[0].mxu0
        %v937 = vadd.f32 0.0, %v936
        %v938 = vpop.f32.mrb[0].mxu0
        %939 = vmatprep.mubr.bf16.mxu0 0
        %940 = vmatmul.mubr.bf16.gmra.mrb[0].mxu0 %v897
        %v941 = vpop.f32.mrb[0].mxu0
        %v942 = vadd.f32 0.0, %v941
        %v943 = vpop.f32.mrb[0].mxu0
        %v944 = vpop.f32.mrb[0].mxu0
        %v945 = vadd.f32 0.0, %v944
        %v946 = vpop.f32.mrb[0].mxu0
        %947 = vdwg.mxu0
        %952 = vrot.lane.b32.xlu0 %v832, 64
        %v953 = vpop.permute.xlu0 %952
        %954 = vrot.lane.b32.xlu0 %v835, 64
        %v955 = vpop.permute.xlu0 %954
        %956 = vrot.lane.b32.xlu0 %v840, 64
        %v957 = vpop.permute.xlu0 %956
        %958 = vrot.lane.b32.xlu0 %v843, 64
        %v959 = vpop.permute.xlu0 %958
        %v964 = vsel %vm692, %v734, %v953
        %v965 = vsel %vm692, %v737, %v955
        %v966 = vsel %vm692, %v742, %v957
        %v967 = vsel %vm692, %v745, %v959
        %v968 = vld [vmem:[%s4] sm:$0x3]
        %v970 = vlaneseq
        %v971 = vshrl.u32 %v970, 7
        %v972 = vsub.s32 0, %v971
        %v973 = vrot.slane %v968, %v972
        %v974 = vlaneseq
        %v975 = vshrl.u32 %v974, 7
        %v976 = vsub.s32 1, %v975
        %v977 = vrot.slane %v968, %v976
        %v980 = vadd.f32 %v964, %v973
        %v981 = vadd.f32 %v934, %v977
        %v982 = vadd.f32 %v965, %v973
        %v983 = vadd.f32 %v937, %v977
        %v984 = vadd.f32 %v966, %v973
        %v985 = vadd.f32 %v942, %v977
        %v986 = vadd.f32 %v967, %v973
        %v987 = vadd.f32 %v945, %v977
        %vm988 = vcmp.ge.f32.partialorder %v980, 0.0
        %vm989 = vcmp.ge.f32.partialorder %v981, 0.0
        %vm990 = vcmp.ge.f32.partialorder %v982, 0.0
        %vm991 = vcmp.ge.f32.partialorder %v983, 0.0
        %vm992 = vcmp.ge.f32.partialorder %v984, 0.0
        %vm993 = vcmp.ge.f32.partialorder %v985, 0.0
        %vm994 = vcmp.ge.f32.partialorder %v986, 0.0
        %vm995 = vcmp.ge.f32.partialorder %v987, 0.0
        %v996 = vld [vmem:[%s5] sm:$0x3]
        %v998 = vlaneseq
        %v999 = vshrl.u32 %v998, 7
        %v1000 = vsub.s32 0, %v999
        %v1001 = vrot.slane %v996, %v1000
        %v1002 = vlaneseq
        %v1003 = vshrl.u32 %v1002, 7
        %v1004 = vsub.s32 1, %v1003
        %v1005 = vrot.slane %v996, %v1004
        %v1008 = vmul.f32 %v1001, %v980
        %v1009 = vmul.f32 %v1005, %v981
        %v1010 = vmul.f32 %v1001, %v982
        %v1011 = vmul.f32 %v1005, %v983
        %v1012 = vmul.f32 %v1001, %v984
        %v1013 = vmul.f32 %v1005, %v985
        %v1014 = vmul.f32 %v1001, %v986
        %v1015 = vmul.f32 %v1005, %v987
        %v1016 = vsel %vm988, %v980, %v1008
        %v1017 = vsel %vm989, %v981, %v1009
        %v1018 = vsel %vm990, %v982, %v1010
        %v1019 = vsel %vm991, %v983, %v1011
        %v1020 = vsel %vm992, %v984, %v1012
        %v1021 = vsel %vm993, %v985, %v1013
        %v1022 = vsel %vm994, %v986, %v1014
        %v1023 = vsel %vm995, %v987, %v1015
        %v1024 = vld [vmem:[%s6] sm:$0xff]
        %v1025 = vld [vmem:[%s6 + $0x8] sm:$0xff]
        %v1026 = vld [vmem:[%s6 + $0x10] sm:$0xff]
        %v1027 = vld [vmem:[%s6 + $0x18] sm:$0xff]
        %v1028 = vld [vmem:[%s6 + $0x20] sm:$0xff]
        %v1029 = vld [vmem:[%s6 + $0x28] sm:$0xff]
        %v1030 = vld [vmem:[%s6 + $0x30] sm:$0xff]
        %v1031 = vld [vmem:[%s6 + $0x38] sm:$0xff]
        %v1032 = vld [vmem:[%s6 + $0x40] sm:$0xff]
        %v1033 = vld [vmem:[%s6 + $0x48] sm:$0xff]
        %v1034 = vld [vmem:[%s6 + $0x50] sm:$0xff]
        %v1035 = vld [vmem:[%s6 + $0x58] sm:$0xff]
        %v1036 = vld [vmem:[%s6 + $0x60] sm:$0xff]
        %v1037 = vld [vmem:[%s6 + $0x68] sm:$0xff]
        %v1038 = vld [vmem:[%s6 + $0x70] sm:$0xff]
        %v1039 = vld [vmem:[%s6 + $0x78] sm:$0xff]
        %v1040 = vld [vmem:[%s6 + $0x80] sm:$0xff]
        %v1041 = vld [vmem:[%s6 + $0x88] sm:$0xff]
        %v1042 = vld [vmem:[%s6 + $0x90] sm:$0xff]
        %v1043 = vld [vmem:[%s6 + $0x98] sm:$0xff]
        %v1044 = vld [vmem:[%s6 + $0xa0] sm:$0xff]
        %v1045 = vld [vmem:[%s6 + $0xa8] sm:$0xff]
        %v1046 = vld [vmem:[%s6 + $0xb0] sm:$0xff]
        %v1047 = vld [vmem:[%s6 + $0xb8] sm:$0xff]
        %v1049 = vsel %vm692, %v1017, 0
        %v1052 = vsel %vm692, %v1019, 0
        %v1055 = vsel %vm692, %v1021, 0
        %v1058 = vsel %vm692, %v1023, 0
        %1060 = vmatprep.subr.mxu0 0.0
        %1061 = vmatpush1.msra.mxu0 %v1024
        %1062 = vmatprep.subr.mxu0 0.0
        %1063 = vmatpush1.msra.mxu0 %v1025
        %1064 = vmatprep.subr.mxu0 0.0
        %1065 = vmatpush1.msra.mxu0 %v1026
        %1066 = vmatprep.subr.mxu0 0.0
        %1067 = vmatpush1.msra.mxu0 %v1027
        %1068 = vmatprep.subr.mxu0 0.0
        %1069 = vmatpush1.msra.mxu0 %v1028
        %1070 = vmatprep.subr.mxu0 0.0
        %1071 = vmatpush1.msra.mxu0 %v1029
        %1072 = vmatprep.subr.mxu0 0.0
        %1073 = vmatpush1.msra.mxu0 %v1030
        %1074 = vmatprep.subr.mxu0 0.0
        %1075 = vmatpush1.msra.mxu0 %v1031
        %1076 = vmatprep.subr.mxu0 0.0
        %1077 = vmatpush1.msra.mxu0 %v1032
        %1078 = vmatprep.subr.mxu0 0.0
        %1079 = vmatpush1.msra.mxu0 %v1033
        %1080 = vmatprep.subr.mxu0 0.0
        %1081 = vmatpush1.msra.mxu0 %v1034
        %1082 = vmatprep.subr.mxu0 0.0
        %1083 = vmatpush1.msra.mxu0 %v1035
        %1084 = vmatprep.subr.mxu0 0.0
        %1085 = vmatpush1.msra.mxu0 %v1036
        %1086 = vmatprep.subr.mxu0 0.0
        %1087 = vmatpush1.msra.mxu0 %v1037
        %1088 = vmatprep.subr.mxu0 0.0
        %1089 = vmatpush1.msra.mxu0 %v1038
        %1090 = vmatprep.subr.mxu0 0.0
        %1091 = vmatpush1.msra.mxu0 %v1039
        %1092 = vmatprep.subr.mxu0 0.0
        %1093 = vmatpush1.msra.mxu0 %v1040
        %1094 = vmatprep.subr.mxu0 0.0
        %1095 = vmatpush1.msra.mxu0 %v1041
        %1096 = vmatprep.subr.mxu0 0.0
        %1097 = vmatpush1.msra.mxu0 %v1042
        %1098 = vmatprep.subr.mxu0 0.0
        %1099 = vmatpush1.msra.mxu0 %v1043
        %1100 = vmatprep.subr.mxu0 0.0
        %1101 = vmatpush1.msra.mxu0 %v1044
        %1102 = vmatprep.subr.mxu0 0.0
        %1103 = vmatpush1.msra.mxu0 %v1045
        %1104 = vmatprep.subr.mxu0 0.0
        %1105 = vmatpush1.msra.mxu0 %v1046
        %1106 = vmatprep.subr.mxu0 0.0
        %1107 = vmatpush1.msra.mxu0 %v1047
        %1108 = vmatprep.subr.mxu0 0.0
        %1109 = vmatpush1.msra.mxu0 0.0
        %1110 = vmatprep.subr.mxu0 0.0
        %1111 = vmatpush1.msra.mxu0 0.0
        %1112 = vmatprep.subr.mxu0 0.0
        %1113 = vmatpush1.msra.mxu0 0.0
        %1114 = vmatprep.subr.mxu0 0.0
        %1115 = vmatpush1.msra.mxu0 0.0
        %1116 = vmatprep.subr.mxu0 0.0
        %1117 = vmatpush1.msra.mxu0 0.0
        %1118 = vmatprep.subr.mxu0 0.0
        %1119 = vmatpush1.msra.mxu0 0.0
        %1120 = vmatprep.subr.mxu0 0.0
        %1121 = vmatpush1.msra.mxu0 0.0
        %1122 = vmatprep.subr.mxu0 0.0
        %1123 = vmatpush1.msra.mxu0 0.0
        %1124 = vmatprep.mubr.f32.mxu0 %v1049
        %1125 = vmatmul.mubr.f32.gmra.mrb[0].mxu0 %v1016
        %v1126 = vpop.f32.mrb[0].mxu0
        %v1127 = vadd.f32 0.0, %v1126
        %v1128 = vpop.f32.mrb[0].mxu0
        %1129 = vmatprep.mubr.f32.mxu0 %v1052
        %1130 = vmatmul.mubr.f32.gmra.mrb[0].mxu0 %v1018
        %v1131 = vpop.f32.mrb[0].mxu0
        %v1132 = vadd.f32 0.0, %v1131
        %v1133 = vpop.f32.mrb[0].mxu0
        %1134 = vmatprep.mubr.f32.mxu0 %v1055
        %1135 = vmatmul.mubr.f32.gmra.mrb[0].mxu0 %v1020
        %v1136 = vpop.f32.mrb[0].mxu0
        %v1137 = vadd.f32 0.0, %v1136
        %v1138 = vpop.f32.mrb[0].mxu0
        %1139 = vmatprep.mubr.f32.mxu0 %v1058
        %1140 = vmatmul.mubr.f32.gmra.mrb[0].mxu0 %v1022
        %v1141 = vpop.f32.mrb[0].mxu0
        %v1142 = vadd.f32 0.0, %v1141
        %v1143 = vpop.f32.mrb[0].mxu0
        %1144 = vdwg.mxu0
        %v1145 = vtanh.pop %v1127
        %v1146 = vtanh.pop %v1132
        %v1147 = vtanh.pop %v1137
        %v1148 = vtanh.pop %v1142
        %vm1149 = vcmask 23552
        %v1150 = vsel %vm1149, %v1145, -inf
        %1151 = vmax.xlane.f32.xlu0 %v1150
        %v1152 = vpop.xlane.xlu0 %1151
        %v1153 = vsel %vm1149, %v1146, -inf
        %1154 = vmax.xlane.f32.xlu0 %v1153
        %v1155 = vpop.xlane.xlu0 %1154
        %v1156 = vsel %vm1149, %v1147, -inf
        %1157 = vmax.xlane.f32.xlu0 %v1156
        %v1158 = vpop.xlane.xlu0 %1157
        %v1159 = vsel %vm1149, %v1148, -inf
        %1160 = vmax.xlane.f32.xlu0 %v1159
        %v1161 = vpop.xlane.xlu0 %1160
        %v1162 = vsub.f32 %v1145, %v1152
        %v1163 = vsub.f32 %v1146, %v1155
        %v1164 = vsub.f32 %v1147, %v1158
        %v1165 = vsub.f32 %v1148, %v1161
        %v1166 = vmul.f32 %v1162, 1.442695
        %v1167 = vpow.pop %v1166
        %v1168 = vmul.f32 %v1163, 1.442695
        %v1169 = vpow.pop %v1168
        %v1170 = vmul.f32 %v1164, 1.442695
        %v1171 = vpow.pop %v1170
        %v1172 = vmul.f32 %v1165, 1.442695
        %v1173 = vpow.pop %v1172
        %v1174 = vsel %vm1149, %v1167, 0.0
        %1175 = vadd.xlane.f32.xlu0 %v1174
        %v1176 = vpop.xlane.xlu0 %1175
        %v1177 = vsel %vm1149, %v1169, 0.0
        %1178 = vadd.xlane.f32.xlu0 %v1177
        %v1179 = vpop.xlane.xlu0 %1178
        %v1180 = vsel %vm1149, %v1171, 0.0
        %1181 = vadd.xlane.f32.xlu0 %v1180
        %v1182 = vpop.xlane.xlu0 %1181
        %v1183 = vsel %vm1149, %v1173, 0.0
        %1184 = vadd.xlane.f32.xlu0 %v1183
        %v1185 = vpop.xlane.xlu0 %1184
        %v1186 = vrcp.pop %v1176
        %v1187 = vmul.f32 %v1167, %v1186
        %v1188 = vrcp.pop %v1179
        %v1189 = vmul.f32 %v1169, %v1188
        %v1190 = vrcp.pop %v1182
        %v1191 = vmul.f32 %v1171, %v1190
        %v1192 = vrcp.pop %v1185
        %v1193 = vmul.f32 %v1173, %v1192
        %vm1194 = vcmask 48152
        %v1195 = vsel %vm1194, %v1145, -inf
        %1196 = vmax.xlane.f32.xlu0 %v1195
        %v1197 = vpop.xlane.xlu0 %1196
        %v1198 = vsel %vm1194, %v1146, -inf
        %1199 = vmax.xlane.f32.xlu0 %v1198
        %v1200 = vpop.xlane.xlu0 %1199
        %v1201 = vsel %vm1194, %v1147, -inf
        %1202 = vmax.xlane.f32.xlu0 %v1201
        %v1203 = vpop.xlane.xlu0 %1202
        %v1204 = vsel %vm1194, %v1148, -inf
        %1205 = vmax.xlane.f32.xlu0 %v1204
        %v1206 = vpop.xlane.xlu0 %1205
        %v1207 = vsub.f32 %v1145, %v1197
        %v1208 = vsub.f32 %v1146, %v1200
        %v1209 = vsub.f32 %v1147, %v1203
        %v1210 = vsub.f32 %v1148, %v1206
        %v1211 = vmul.f32 %v1207, 1.442695
        %v1212 = vpow.pop %v1211
        %v1213 = vmul.f32 %v1208, 1.442695
        %v1214 = vpow.pop %v1213
        %v1215 = vmul.f32 %v1209, 1.442695
        %v1216 = vpow.pop %v1215
        %v1217 = vmul.f32 %v1210, 1.442695
        %v1218 = vpow.pop %v1217
        %1223 = vrot.lane.b32.xlu0 %v1212, 125
        %v1224 = vpop.permute.xlu0 %1223
        %1225 = vrot.lane.b32.xlu0 %v1214, 125
        %v1226 = vpop.permute.xlu0 %1225
        %1227 = vrot.lane.b32.xlu0 %v1216, 125
        %v1228 = vpop.permute.xlu0 %1227
        %1229 = vrot.lane.b32.xlu0 %v1218, 125
        %v1230 = vpop.permute.xlu0 %1229
        %v1235 = vsel %vm1149, %v1224, 0.0
        %1236 = vadd.xlane.f32.xlu0 %v1235
        %v1237 = vpop.xlane.xlu0 %1236
        %v1238 = vsel %vm1149, %v1226, 0.0
        %1239 = vadd.xlane.f32.xlu0 %v1238
        %v1240 = vpop.xlane.xlu0 %1239
        %v1241 = vsel %vm1149, %v1228, 0.0
        %1242 = vadd.xlane.f32.xlu0 %v1241
        %v1243 = vpop.xlane.xlu0 %1242
        %v1244 = vsel %vm1149, %v1230, 0.0
        %1245 = vadd.xlane.f32.xlu0 %v1244
        %v1246 = vpop.xlane.xlu0 %1245
        %v1247 = vrcp.pop %v1237
        %v1248 = vmul.f32 %v1212, %v1247
        %v1249 = vrcp.pop %v1240
        %v1250 = vmul.f32 %v1214, %v1249
        %v1251 = vrcp.pop %v1243
        %v1252 = vmul.f32 %v1216, %v1251
        %v1253 = vrcp.pop %v1246
        %v1254 = vmul.f32 %v1218, %v1253
        %1256 = vset.pattern.permute.xlu0 0
        %1257 = vperm.xlu0 %1256, %v1187
        %v1258 = vpop.permute.xlu0 %1257
        %1261 = vset.pattern.permute.xlu0 0
        %1262 = vperm.xlu0 %1261, %v1189
        %v1263 = vpop.permute.xlu0 %1262
        %1266 = vset.pattern.permute.xlu0 0
        %1267 = vperm.xlu0 %1266, %v1191
        %v1268 = vpop.permute.xlu0 %1267
        %1271 = vset.pattern.permute.xlu0 0
        %1272 = vperm.xlu0 %1271, %v1193
        %v1273 = vpop.permute.xlu0 %1272
        %v1275 = vmul.f32 %v1258, %v1016
        %v1276 = vmul.f32 %v1263, %v1018
        %v1277 = vmul.f32 %v1268, %v1020
        %v1278 = vmul.f32 %v1273, %v1022
        %1280 = vset.pattern.permute.xlu0 3
        %1281 = vperm.xlu0 %1280, %v1248
        %v1282 = vpop.permute.xlu0 %1281
        %1285 = vset.pattern.permute.xlu0 3
        %1286 = vperm.xlu0 %1285, %v1250
        %v1287 = vpop.permute.xlu0 %1286
        %1290 = vset.pattern.permute.xlu0 3
        %1291 = vperm.xlu0 %1290, %v1252
        %v1292 = vpop.permute.xlu0 %1291
        %1295 = vset.pattern.permute.xlu0 3
        %1296 = vperm.xlu0 %1295, %v1254
        %v1297 = vpop.permute.xlu0 %1296
        %v1299 = vmul.f32 %v1282, %v1016
        %v1300 = vmul.f32 %v1287, %v1018
        %v1301 = vmul.f32 %v1292, %v1020
        %v1302 = vmul.f32 %v1297, %v1022
        %1303 = vset.pattern.permute.xlu0 1
        %1304 = vperm.xlu0 %1303, %v1187
        %v1305 = vpop.permute.xlu0 %1304
        %1307 = vset.pattern.permute.xlu0 1
        %1308 = vperm.xlu0 %1307, %v1189
        %v1309 = vpop.permute.xlu0 %1308
        %1311 = vset.pattern.permute.xlu0 1
        %1312 = vperm.xlu0 %1311, %v1191
        %v1313 = vpop.permute.xlu0 %1312
        %1315 = vset.pattern.permute.xlu0 1
        %1316 = vperm.xlu0 %1315, %v1193
        %v1317 = vpop.permute.xlu0 %1316
        %v1319 = vmul.f32 %v1305, %v1016
        %v1320 = vmul.f32 %v1309, %v1018
        %v1321 = vmul.f32 %v1313, %v1020
        %v1322 = vmul.f32 %v1317, %v1022
        %1327 = vrot.lane.b32.xlu0 %v1319, 64
        %v1328 = vpop.permute.xlu0 %1327
        %1329 = vrot.lane.b32.xlu0 %v1320, 64
        %v1330 = vpop.permute.xlu0 %1329
        %1331 = vrot.lane.b32.xlu0 %v1321, 64
        %v1332 = vpop.permute.xlu0 %1331
        %1333 = vrot.lane.b32.xlu0 %v1322, 64
        %v1334 = vpop.permute.xlu0 %1333
        %v1339 = vadd.f32 %v1275, %v1328
        %v1340 = vadd.f32 %v1276, %v1330
        %v1341 = vadd.f32 %v1277, %v1332
        %v1342 = vadd.f32 %v1278, %v1334
        %1343 = vset.pattern.permute.xlu0 4
        %1344 = vperm.xlu0 %1343, %v1248
        %v1345 = vpop.permute.xlu0 %1344
        %1347 = vset.pattern.permute.xlu0 4
        %1348 = vperm.xlu0 %1347, %v1250
        %v1349 = vpop.permute.xlu0 %1348
        %1351 = vset.pattern.permute.xlu0 4
        %1352 = vperm.xlu0 %1351, %v1252
        %v1353 = vpop.permute.xlu0 %1352
        %1355 = vset.pattern.permute.xlu0 4
        %1356 = vperm.xlu0 %1355, %v1254
        %v1357 = vpop.permute.xlu0 %1356
        %v1359 = vmul.f32 %v1345, %v1016
        %v1360 = vmul.f32 %v1349, %v1018
        %v1361 = vmul.f32 %v1353, %v1020
        %v1362 = vmul.f32 %v1357, %v1022
        %1367 = vrot.lane.b32.xlu0 %v1359, 64
        %v1368 = vpop.permute.xlu0 %1367
        %1369 = vrot.lane.b32.xlu0 %v1360, 64
        %v1370 = vpop.permute.xlu0 %1369
        %1371 = vrot.lane.b32.xlu0 %v1361, 64
        %v1372 = vpop.permute.xlu0 %1371
        %1373 = vrot.lane.b32.xlu0 %v1362, 64
        %v1374 = vpop.permute.xlu0 %1373
        %v1379 = vadd.f32 %v1299, %v1368
        %v1380 = vadd.f32 %v1300, %v1370
        %v1381 = vadd.f32 %v1301, %v1372
        %v1382 = vadd.f32 %v1302, %v1374
        %1383 = vset.pattern.permute.xlu0 2
        %1384 = vperm.xlu0 %1383, %v1187
        %v1385 = vpop.permute.xlu0 %1384
        %1387 = vset.pattern.permute.xlu0 2
        %1388 = vperm.xlu0 %1387, %v1189
        %v1389 = vpop.permute.xlu0 %1388
        %1391 = vset.pattern.permute.xlu0 2
        %1392 = vperm.xlu0 %1391, %v1191
        %v1393 = vpop.permute.xlu0 %1392
        %1395 = vset.pattern.permute.xlu0 2
        %1396 = vperm.xlu0 %1395, %v1193
        %v1397 = vpop.permute.xlu0 %1396
        %v1399 = vmul.f32 %v1385, %v1017
        %v1400 = vmul.f32 %v1389, %v1019
        %v1401 = vmul.f32 %v1393, %v1021
        %v1402 = vmul.f32 %v1397, %v1023
        %v1403 = vadd.f32 %v1339, %v1399
        %v1404 = vadd.f32 %v1340, %v1400
        %v1405 = vadd.f32 %v1341, %v1401
        %v1406 = vadd.f32 %v1342, %v1402
        %1407 = vset.pattern.permute.xlu0 5
        %1408 = vperm.xlu0 %1407, %v1248
        %v1409 = vpop.permute.xlu0 %1408
        %1411 = vset.pattern.permute.xlu0 5
        %1412 = vperm.xlu0 %1411, %v1250
        %v1413 = vpop.permute.xlu0 %1412
        %1415 = vset.pattern.permute.xlu0 5
        %1416 = vperm.xlu0 %1415, %v1252
        %v1417 = vpop.permute.xlu0 %1416
        %1419 = vset.pattern.permute.xlu0 5
        %1420 = vperm.xlu0 %1419, %v1254
        %v1421 = vpop.permute.xlu0 %1420
        %v1423 = vmul.f32 %v1409, %v1017
        %v1424 = vmul.f32 %v1413, %v1019
        %v1425 = vmul.f32 %v1417, %v1021
        %v1426 = vmul.f32 %v1421, %v1023
        %v1427 = vadd.f32 %v1379, %v1423
        %v1428 = vadd.f32 %v1380, %v1424
        %v1429 = vadd.f32 %v1381, %v1425
        %v1430 = vadd.f32 %v1382, %v1426
        %s1431 = smul.u32 %s23, 32
        %s1432 = scalar_lea.vmem [#allocation4], %s1431
        %1433 = vst.msk [vmem:[%s1432] sm:$0xff] %vm661, %v1403
        %1434 = vst.msk [vmem:[%s1432 + $0x8] sm:$0xff] %vm661, %v1404
        %1435 = vst.msk [vmem:[%s1432 + $0x10] sm:$0xff] %vm661, %v1405
        %1436 = vst.msk [vmem:[%s1432 + $0x18] sm:$0xff] %vm661, %v1406
        %1441 = vrot.lane.b32.xlu0 %v1427, 96
        %v1442 = vpop.permute.xlu0 %1441
        %1443 = vrot.lane.b32.xlu0 %v1428, 96
        %v1444 = vpop.permute.xlu0 %1443
        %1445 = vrot.lane.b32.xlu0 %v1429, 96
        %v1446 = vpop.permute.xlu0 %1445
        %1447 = vrot.lane.b32.xlu0 %v1430, 96
        %v1448 = vpop.permute.xlu0 %1447
        %s1453 = scalar_lea.vmem [#allocation5], %s1431
        %1454 = vst.msk [vmem:[%s1453] sm:$0xff] %vm661, %v1442
        %1455 = vst.msk [vmem:[%s1453 + $0x8] sm:$0xff] %vm661, %v1444
        %1456 = vst.msk [vmem:[%s1453 + $0x10] sm:$0xff] %vm661, %v1446
        %1457 = vst.msk [vmem:[%s1453 + $0x18] sm:$0xff] %vm661, %v1448
        %p1458 = scmp.eq.s32.totalorder %s23, 1
        // Predicated region
        $region102: #{tpu_custom_call.1} parent=92 // pred_check
          %p1459 = pneg %p1458
        $region103: #{tpu_custom_call.1} parent=92 // pred_check_branch
          %1461 = sbr.rel (%p1459) target = $region105
        $region104: #{tpu_custom_call.1} parent=92 // pred_region
          %v1462 = vld [vmem:[#allocation4] sm:$0xff]
          %v1463 = vld [vmem:[#allocation4 + $0x8] sm:$0xff]
          %v1464 = vld [vmem:[#allocation4 + $0x10] sm:$0xff]
          %v1465 = vld [vmem:[#allocation4 + $0x18] sm:$0xff]
          %v1466 = vld [vmem:[#allocation4 + $0x20] sm:$0xff]
          %v1467 = vld [vmem:[#allocation4 + $0x28] sm:$0xff]
          %v1468 = vld [vmem:[#allocation4 + $0x30] sm:$0xff]
          %v1469 = vld [vmem:[#allocation4 + $0x38] sm:$0xff]
          %v1470 = vsel %vm661, %v1462, 0.0
          %v1471 = vsel %vm661, %v1463, 0.0
          %v1472 = vadd.f32 %v1470, %v1471
          %v1473 = vsel %vm661, %v1464, 0.0
          %v1474 = vadd.f32 %v1472, %v1473
          %v1475 = vsel %vm661, %v1465, 0.0
          %v1476 = vadd.f32 %v1474, %v1475
          %v1477 = vsel %vm661, %v1466, 0.0
          %v1478 = vadd.f32 %v1476, %v1477
          %v1479 = vsel %vm661, %v1467, 0.0
          %v1480 = vadd.f32 %v1478, %v1479
          %v1481 = vsel %vm661, %v1468, 0.0
          %v1482 = vadd.f32 %v1480, %v1481
          %v1483 = vsel %vm661, %v1469, 0.0
          %v1484 = vadd.f32 %v1482, %v1483
          %v1485 = vrot.slane %v1484, 4
          %v1486 = vadd.f32 %v1484, %v1485
          %v1487 = vrot.slane %v1486, 2
          %v1488 = vadd.f32 %v1486, %v1487
          %v1489 = vrot.slane %v1488, 1
          %v1490 = vadd.f32 %v1488, %v1489
          %v1491 = vrcp.pop 64.0
          %v1492 = vmul.f32 %v1490, %v1491
          %v1493 = vxor.u32 %v1492, 2147483648
          %v1494 = vmul.f32 %v1493, 1.442695
          %v1495 = vpow.pop %v1494
          %v1496 = vadd.f32 %v1495, 1.0
          %v1497 = vrcp.pop %v1496
          %v1498 = vmul.f32 1.0, %v1497
          %v1499 = vld [vmem:[%s7] sm:$0xff]
          %v1500 = vld [vmem:[%s7 + $0x8] sm:$0xff]
          %v1501 = vld [vmem:[%s7 + $0x10] sm:$0xff]
          %v1502 = vld [vmem:[%s7 + $0x18] sm:$0xff]
          %v1504 = vsel %vm661, %v1498, 0
          %v1507 = vsel %vm661, %v1499, 0
          %v1510 = vsel %vm661, %v1500, 0
          %v1513 = vsel %vm661, %v1501, 0
          %v1516 = vsel %vm661, %v1502, 0
          %1518 = vmatprep.subr.mxu0 0.0
          %1519 = vmatpush1.xpose.msra.mxu0 %v1507
          %1520 = vmatprep.subr.mxu0 0.0
          %1521 = vmatpush1.xpose.msra.mxu0 %v1510
          %1522 = vmatprep.subr.mxu0 0.0
          %1523 = vmatpush1.xpose.msra.mxu0 %v1513
          %1524 = vmatprep.subr.mxu0 0.0
          %1525 = vmatpush1.xpose.msra.mxu0 %v1516
          %1526 = vmatprep.subr.mxu0 0.0
          %1527 = vmatpush1.xpose.msra.mxu0 0.0
          %1528 = vmatprep.subr.mxu0 0.0
          %1529 = vmatpush1.xpose.msra.mxu0 0.0
          %1530 = vmatprep.subr.mxu0 0.0
          %1531 = vmatpush1.xpose.msra.mxu0 0.0
          %1532 = vmatprep.subr.mxu0 0.0
          %1533 = vmatpush1.xpose.msra.mxu0 0.0
          %1534 = vmatprep.subr.mxu0 0.0
          %1535 = vmatpush1.xpose.msra.mxu0 0.0
          %1536 = vmatprep.subr.mxu0 0.0
          %1537 = vmatpush1.xpose.msra.mxu0 0.0
          %1538 = vmatprep.subr.mxu0 0.0
          %1539 = vmatpush1.xpose.msra.mxu0 0.0
          %1540 = vmatprep.subr.mxu0 0.0
          %1541 = vmatpush1.xpose.msra.mxu0 0.0
          %1542 = vmatprep.subr.mxu0 0.0
          %1543 = vmatpush1.xpose.msra.mxu0 0.0
          %1544 = vmatprep.subr.mxu0 0.0
          %1545 = vmatpush1.xpose.msra.mxu0 0.0
          %1546 = vmatprep.subr.mxu0 0.0
          %1547 = vmatpush1.xpose.msra.mxu0 0.0
          %1548 = vmatprep.subr.mxu0 0.0
          %1549 = vmatpush1.xpose.msra.mxu0 0.0
          %1550 = vmatprep.subr.mxu0 0.0
          %1551 = vmatpush1.xpose.msra.mxu0 0.0
          %1552 = vmatprep.subr.mxu0 0.0
          %1553 = vmatpush1.xpose.msra.mxu0 0.0
          %1554 = vmatprep.subr.mxu0 0.0
          %1555 = vmatpush1.xpose.msra.mxu0 0.0
          %1556 = vmatprep.subr.mxu0 0.0
          %1557 = vmatpush1.xpose.msra.mxu0 0.0
          %1558 = vmatprep.subr.mxu0 0.0
          %1559 = vmatpush1.xpose.msra.mxu0 0.0
          %1560 = vmatprep.subr.mxu0 0.0
          %1561 = vmatpush1.xpose.msra.mxu0 0.0
          %1562 = vmatprep.subr.mxu0 0.0
          %1563 = vmatpush1.xpose.msra.mxu0 0.0
          %1564 = vmatprep.subr.mxu0 0.0
          %1565 = vmatpush1.xpose.msra.mxu0 0.0
          %1566 = vmatprep.subr.mxu0 0.0
          %1567 = vmatpush1.xpose.msra.mxu0 0.0
          %1568 = vmatprep.subr.mxu0 0.0
          %1569 = vmatpush1.xpose.msra.mxu0 0.0
          %1570 = vmatprep.subr.mxu0 0.0
          %1571 = vmatpush1.xpose.msra.mxu0 0.0
          %1572 = vmatprep.subr.mxu0 0.0
          %1573 = vmatpush1.xpose.msra.mxu0 0.0
          %1574 = vmatprep.subr.mxu0 0.0
          %1575 = vmatpush1.xpose.msra.mxu0 0.0
          %1576 = vmatprep.subr.mxu0 0.0
          %1577 = vmatpush1.xpose.msra.mxu0 0.0
          %1578 = vmatprep.subr.mxu0 0.0
          %1579 = vmatpush1.xpose.msra.mxu0 0.0
          %1580 = vmatprep.subr.mxu0 0.0
          %1581 = vmatpush1.xpose.msra.mxu0 0.0
          %1582 = vmatprep.mubr.f32.mxu0 0.0
          %1583 = vmatmul.mubr.f32.gmra.mrb[0].mxu0 %v1504
          %v1584 = vpop.f32.mrb[0].mxu0
          %v1585 = vadd.f32 0.0, %v1584
          %v1586 = vpop.f32.mrb[0].mxu0
          %1587 = vdwg.mxu0
          %v1588 = vld [vmem:[#allocation5] sm:$0xff]
          %v1589 = vld [vmem:[#allocation5 + $0x8] sm:$0xff]
          %v1590 = vld [vmem:[#allocation5 + $0x10] sm:$0xff]
          %v1591 = vld [vmem:[#allocation5 + $0x18] sm:$0xff]
          %v1592 = vld [vmem:[#allocation5 + $0x20] sm:$0xff]
          %v1593 = vld [vmem:[#allocation5 + $0x28] sm:$0xff]
          %v1594 = vld [vmem:[#allocation5 + $0x30] sm:$0xff]
          %v1595 = vld [vmem:[#allocation5 + $0x38] sm:$0xff]
          %v1596 = vld [vmem:[#allocation6] sm:$0x1]
          %1598 = vset.pattern.permute.xlu0 0
          %1599 = vperm.xlu0 %1598, %v1596
          %v1600 = vpop.permute.xlu0 %1599
          %v1602 = vlaneseq
          %v1603 = vshrl.u32 %v1602, 7
          %v1604 = vsub.s32 0, %v1603
          %v1605 = vrot.slane %v1600, %v1604
          %v1607 = vsel %vm661, %v1585, 0
          %v1610 = vsel %vm661, %v1462, 0
          %v1613 = vsel %vm661, %v1463, 0
          %v1616 = vsel %vm661, %v1464, 0
          %v1619 = vsel %vm661, %v1465, 0
          %v1622 = vsel %vm661, %v1466, 0
          %v1625 = vsel %vm661, %v1467, 0
          %v1628 = vsel %vm661, %v1468, 0
          %v1631 = vsel %vm661, %v1469, 0
          %v1634 = vsel %vm661, %v1588, 0
          %v1637 = vsel %vm661, %v1589, 0
          %v1640 = vsel %vm661, %v1590, 0
          %v1643 = vsel %vm661, %v1591, 0
          %v1646 = vsel %vm661, %v1592, 0
          %v1649 = vsel %vm661, %v1593, 0
          %v1652 = vsel %vm661, %v1594, 0
          %v1655 = vsel %vm661, %v1595, 0
          %1657 = vmatprep.subr.mxu0 0.0
          %1658 = vmatpush1.xpose.msra.mxu0 %v1610
          %1659 = vmatprep.subr.mxu0 0.0
          %1660 = vmatpush1.xpose.msra.mxu0 %v1613
          %1661 = vmatprep.subr.mxu0 0.0
          %1662 = vmatpush1.xpose.msra.mxu0 %v1616
          %1663 = vmatprep.subr.mxu0 0.0
          %1664 = vmatpush1.xpose.msra.mxu0 %v1619
          %1665 = vmatprep.subr.mxu0 0.0
          %1666 = vmatpush1.xpose.msra.mxu0 %v1622
          %1667 = vmatprep.subr.mxu0 0.0
          %1668 = vmatpush1.xpose.msra.mxu0 %v1625
          %1669 = vmatprep.subr.mxu0 0.0
          %1670 = vmatpush1.xpose.msra.mxu0 %v1628
          %1671 = vmatprep.subr.mxu0 0.0
          %1672 = vmatpush1.xpose.msra.mxu0 %v1631
          %1673 = vmatprep.subr.mxu0 0.0
          %1674 = vmatpush1.xpose.msra.mxu0 %v1634
          %1675 = vmatprep.subr.mxu0 0.0
          %1676 = vmatpush1.xpose.msra.mxu0 %v1637
          %1677 = vmatprep.subr.mxu0 0.0
          %1678 = vmatpush1.xpose.msra.mxu0 %v1640
          %1679 = vmatprep.subr.mxu0 0.0
          %1680 = vmatpush1.xpose.msra.mxu0 %v1643
          %1681 = vmatprep.subr.mxu0 0.0
          %1682 = vmatpush1.xpose.msra.mxu0 %v1646
          %1683 = vmatprep.subr.mxu0 0.0
          %1684 = vmatpush1.xpose.msra.mxu0 %v1649
          %1685 = vmatprep.subr.mxu0 0.0
          %1686 = vmatpush1.xpose.msra.mxu0 %v1652
          %1687 = vmatprep.subr.mxu0 0.0
          %1688 = vmatpush1.xpose.msra.mxu0 %v1655
          %1689 = vmatprep.subr.mxu0 0.0
          %1690 = vmatpush1.xpose.msra.mxu0 0.0
          %1691 = vmatprep.subr.mxu0 0.0
          %1692 = vmatpush1.xpose.msra.mxu0 0.0
          %1693 = vmatprep.subr.mxu0 0.0
          %1694 = vmatpush1.xpose.msra.mxu0 0.0
          %1695 = vmatprep.subr.mxu0 0.0
          %1696 = vmatpush1.xpose.msra.mxu0 0.0
          %1697 = vmatprep.subr.mxu0 0.0
          %1698 = vmatpush1.xpose.msra.mxu0 0.0
          %1699 = vmatprep.subr.mxu0 0.0
          %1700 = vmatpush1.xpose.msra.mxu0 0.0
          %1701 = vmatprep.subr.mxu0 0.0
          %1702 = vmatpush1.xpose.msra.mxu0 0.0
          %1703 = vmatprep.subr.mxu0 0.0
          %1704 = vmatpush1.xpose.msra.mxu0 0.0
          %1705 = vmatprep.subr.mxu0 0.0
          %1706 = vmatpush1.xpose.msra.mxu0 0.0
          %1707 = vmatprep.subr.mxu0 0.0
          %1708 = vmatpush1.xpose.msra.mxu0 0.0
          %1709 = vmatprep.subr.mxu0 0.0
          %1710 = vmatpush1.xpose.msra.mxu0 0.0
          %1711 = vmatprep.subr.mxu0 0.0
          %1712 = vmatpush1.xpose.msra.mxu0 0.0
          %1713 = vmatprep.subr.mxu0 0.0
          %1714 = vmatpush1.xpose.msra.mxu0 0.0
          %1715 = vmatprep.subr.mxu0 0.0
          %1716 = vmatpush1.xpose.msra.mxu0 0.0
          %1717 = vmatprep.subr.mxu0 0.0
          %1718 = vmatpush1.xpose.msra.mxu0 0.0
          %1719 = vmatprep.subr.mxu0 0.0
          %1720 = vmatpush1.xpose.msra.mxu0 0.0
          %1721 = vmatprep.mubr.f32.mxu0 0.0
          %1722 = vmatmul.mubr.f32.gmra.mrb[0].mxu0 %v1607
          %v1723 = vpop.f32.mrb[0].mxu0
          %v1724 = vadd.f32 %v1605, %v1723
          %v1725 = vpop.f32.mrb[0].mxu0
          %1726 = vdwg.mxu0
          %1727 = vst [vmem:[#allocation8] sm:$0x1] %v1724
        $region105: #{tpu_custom_call.1} parent=92 // pred_fallthru
          _
        // Predicated region
        $region106: #{tpu_custom_call.1} parent=92 // pred_check
          %p1728 = pneg %p230
        $region107: #{tpu_custom_call.1} parent=92 // pred_check_branch
          %1730 = sbr.rel (%p1728) target = $region109
        $region108: #{tpu_custom_call.1} parent=92 // pred_region
          %s1732 = ssub.s32 16, 16
          %1733 = vsyncadd [#allocation9], %s1732
          %s1735 = sshll.u32 [#allocation8], 4
          %s1736 = int_to_ptr.vmem [resolvable:$true] %s1735
          %1738 = dma.vmem_to_hbm [thread:$0]  %s1736, 16, %s9, [#allocation9]
        $region109: #{tpu_custom_call.1} parent=92 // pred_fallthru
          _
        // Predicated region
        $region110: #{tpu_custom_call.1} parent=92 // pred_check
          %p1739 = pneg %p230
        $region111: #{tpu_custom_call.1} parent=92 // pred_check_branch
          %1741 = sbr.rel (%p1739) target = $region113
        $region112: #{tpu_custom_call.1} parent=92 // pred_region
          %1742 = dma.done [#allocation9], 16
        $region113: #{tpu_custom_call.1} parent=92 // pred_fallthru
          _
      $region93: #{tpu_custom_call.1} parent=5 // pred_fallthru
        _
      %p1743 = scmp.le.s32.totalorder 2, %s18
      // Predicated region
      $region114: #{tpu_custom_call.1} parent=5 // pred_check
        %p1744 = pneg %p1743
      $region115: #{tpu_custom_call.1} parent=5 // pred_check_branch
        %1746 = sbr.rel (%p1744) target = $region117
      $region116: #{tpu_custom_call.1} parent=5 // pred_region
        %s1747 = ssub.s32 %s18, 2
      $region117: #{tpu_custom_call.1} parent=5 // pred_fallthru
        _
    $region6: #{tpu_custom_call.1} parent=1 // loop_footer
      %s22 = sadd.s32 1, %s18
    $region7: #{tpu_custom_call.1} parent=1 // loop_footer_branch
      %17 = sbr.rel target = $region3
    $region8: #{tpu_custom_call.1} parent=1 // loop_exit
      _
    %1748 = vsyncpa [#allocation9], 1
    %s1749 = scalar_lea.sflag [#allocation9], 1
    %1750 = vsyncpa %s1749, 1

</llo_original>
